<compile_context>
chip_gen: v7x
topology: tpu7x:2x2x1
jax: 0.10.0
libtpu: 0.0.40
codegen_flags: <defaults>
</compile_context>

<pallas_src>
import functools
import math

import jax
import jax.numpy as jnp
from jax.experimental import pallas as pl
from jax.experimental.pallas import tpu as pltpu

# ---- "config" (synthetic, small) -------------------------------------------
INPUT_DIM = 8      # config.input_dim
HID_DIM = 32       # config.hid_dim
NUM_LAYER = 2      # config.num_layer
OUTPUT_DIM = 4     # config.output_dim
SEQ_LEN = 12       # input sequence length (>= 10 so out[:, -10:, :] is a crop)
BATCH = 2
LAST_T = 10        # the hard-coded -10 slice in forward()
SUBLANE = 8        # rows per batch block (TPU sublane count)

assert NUM_LAYER == 2, "fused skewed-pipeline kernel is specialised to 2 layers"


# ---- fused Pallas kernel ----------------------------------------------------
def _fused_netlstm_kernel(T, BB, H, LT,
                          x_ref, w0_ref, wrec_ref, ball_ref,
                          h0_ref, c0_ref,
                          w2_ref, b2_ref, w3_ref, b3_ref,
                          y_ref, hN_ref, cN_ref):
    """Whole netLSTM forward for one 8-row batch block, entirely in VMEM.

    x_ref   : (1, T*BB, D)   time-major rows (row = t*BB + b_local)
    w0_ref  : (D, 8H)        Wih0^T scattered into [i0,_,f0,_,o0,_,g0,_] cols
    wrec_ref: (2H, 8H)       [[whh0|wih1|whh0|wih1|...],[0|whh1|0|whh1|...]]
    ball_ref: (1, 8H)        [b0_i,b1_i,b0_f,b1_f,b0_o,b1_o,b0_g,b1_g]
    h0/c0   : (2, BB, H)     initial state per layer
    w2/b2   : (H, H/2),(1,H/2)   fc2 (pre-transposed)
    w3/b3   : (H/2, O),(1,O)     fc3 (pre-transposed)
    y_ref   : (1, LT*BB, O)  head output, time-major (wrapper permutes)
    hN/cN   : (2, BB, H)     final states
    """
    f32 = jnp.float32
    H2 = 2 * H

    # Hoist all weight loads out of the unrolled loop.
    w_rec = wrec_ref[...]                      # (2H, 8H)
    w2 = w2_ref[...]
    b2 = b2_ref[...]
    w3 = w3_ref[...]
    b3 = b3_ref[...]

    # Hoisted layer-0 input projection + BOTH layers' biases, already in the
    # wide interleaved gate layout: one matmul + one bias row for all T steps.
    gbias = (jnp.dot(x_ref[0], w0_ref[...], preferred_element_type=f32)
             + ball_ref[...])                  # (T*BB, 8H)

    h1_init = h0_ref[1]
    c1_init = c0_ref[1]
    # Carried state is the lane-concat of both layers: [h0 | h1], [c0 | c1].
    h_carry = jnp.concatenate([h0_ref[0], h1_init], axis=-1)   # (BB, 2H)
    c_carry = jnp.concatenate([c0_ref[0], c1_init], axis=-1)   # (BB, 2H)

    tail = []
    # Skewed pipeline, fully unrolled: iteration k computes layer-0 step k and
    # layer-1 step k-1 with ONE fused matmul.  k=0 has a phantom layer-1 half,
    # k=T has a phantom layer-0 half; both are discarded.
    for k in range(T + 1):
        kb = min(k, T - 1) * BB
        gates = (jnp.dot(h_carry, w_rec, preferred_element_type=f32)
                 + gbias[kb:kb + BB, :])                        # (BB, 8H)
        s = jax.nn.sigmoid(gates)       # one sigmoid over the stacked slab
        i = s[:, 0 * H2:1 * H2]         # [i0 | i1]
        f = s[:, 1 * H2:2 * H2]         # [f0 | f1]
        o = s[:, 2 * H2:3 * H2]         # [o0 | o1]
        g = jnp.tanh(gates[:, 3 * H2:4 * H2])                   # [g0 | g1]
        c_new = f * c_carry + i * g                              # (BB, 2H)
        h_new = o * jnp.tanh(c_new)                              # (BB, 2H)

        if k == T - 1:                  # layer-0 just finished its last step
            hN_ref[0] = h_new[:, :H]
            cN_ref[0] = c_new[:, :H]
        if k >= 1 and (k - 1) >= T - LT:
            tail.append(h_new[:, H:])   # layer-1 tail timestep k-1

        if k == T:
            hN_ref[1] = h_new[:, H:]
            cN_ref[1] = c_new[:, H:]
        elif k == 0:
            # layer-1 half of iteration 0 is a phantom step: restore its
            # initial state before the real layer-1 step 0 runs at k=1.
            h_carry = jnp.concatenate([h_new[:, :H], h1_init], axis=-1)
            c_carry = jnp.concatenate([c_new[:, :H], c1_init], axis=-1)
        else:
            h_carry = h_new
            c_carry = c_new

    # Batched FC head epilogue: 2 matmuls + 1 contiguous store.
    hcat = jnp.concatenate(tail, axis=0)                         # (LT*BB, H)
    z = jnp.maximum(jnp.dot(hcat, w2, preferred_element_type=f32) + b2, 0.0)
    y_ref[0] = jnp.dot(z, w3, preferred_element_type=f32) + b3   # (LT*BB, O)


def _fused_call(kparams, x2d, h0p, c0p, T, G, LT):
    BB = SUBLANE
    H = HID_DIM
    D = x2d.shape[-1]
    O = OUTPUT_DIM
    kernel = functools.partial(_fused_netlstm_kernel, T, BB, H, LT)
    return pl.pallas_call(
        kernel,
        grid=(G,),
        out_shape=(
            jax.ShapeDtypeStruct((G, LT * BB, O), jnp.float32),
            jax.ShapeDtypeStruct((NUM_LAYER, G * BB, H), jnp.float32),
            jax.ShapeDtypeStruct((NUM_LAYER, G * BB, H), jnp.float32),
        ),
        in_specs=[
            pl.BlockSpec((1, T * BB, D), lambda g: (g, 0, 0)),
            pl.BlockSpec((D, 8 * H), lambda g: (0, 0)),
            pl.BlockSpec((2 * H, 8 * H), lambda g: (0, 0)),
            pl.BlockSpec((1, 8 * H), lambda g: (0, 0)),
            pl.BlockSpec((NUM_LAYER, BB, H), lambda g: (0, g, 0)),
            pl.BlockSpec((NUM_LAYER, BB, H), lambda g: (0, g, 0)),
            pl.BlockSpec((H, H // 2), lambda g: (0, 0)),
            pl.BlockSpec((1, H // 2), lambda g: (0, 0)),
            pl.BlockSpec((H // 2, O), lambda g: (0, 0)),
            pl.BlockSpec((1, O), lambda g: (0, 0)),
        ],
        out_specs=(
            pl.BlockSpec((1, LT * BB, O), lambda g: (g, 0, 0)),
            pl.BlockSpec((NUM_LAYER, BB, H), lambda g: (0, g, 0)),
            pl.BlockSpec((NUM_LAYER, BB, H), lambda g: (0, g, 0)),
        ),
        compiler_params=pltpu.CompilerParams(
            dimension_semantics=("parallel",)),
    )(x2d, kparams["w0_wide"], kparams["w_rec"], kparams["b_all"],
      h0p, c0p,
      kparams["fc2_w"], kparams["fc2_b"],
      kparams["fc3_w"], kparams["fc3_b"])


@jax.jit
def net_lstm_forward(kparams, x, h0, c0):
    """x: (B, T, INPUT_DIM); h0/c0: (NUM_LAYER, B, HID_DIM)."""
    B, T, D = x.shape
    LT = min(LAST_T, T)
    Bp = ((B + SUBLANE - 1) // SUBLANE) * SUBLANE   # pad batch to sublane mult
    G = Bp // SUBLANE
    pad = Bp - B

    xp = jnp.pad(x.astype(jnp.float32), ((0, pad), (0, 0), (0, 0)))
    # (Bp,T,D) -> per 8-row batch block, time-major rows: (G, T*8, D)
    x2d = (xp.reshape(G, SUBLANE, T, D)
             .transpose(0, 2, 1, 3)
             .reshape(G, T * SUBLANE, D))
    h0p = jnp.pad(h0.astype(jnp.float32), ((0, 0), (0, pad), (0, 0)))
    c0p = jnp.pad(c0.astype(jnp.float32), ((0, 0), (0, pad), (0, 0)))

    y_k, hN, cN = _fused_call(kparams, x2d, h0p, c0p, T, G, LT)

    # Kernel emits head rows time-major per block; the module's
    # out[:, -10:, :].view(-1, H) ordering is batch-major.
    y = (y_k.reshape(G, LT, SUBLANE, OUTPUT_DIM)
            .transpose(0, 2, 1, 3)
            .reshape(Bp, LT, OUTPUT_DIM)[:B]
            .reshape(B * LT, OUTPUT_DIM))
    return y, (hN[:, :B], cN[:, :B])


# ---- parameters -------------------------------------------------------------
def init_raw_params(key):
    """Deterministic PyTorch-style params in PyTorch layout (gate order i,f,g,o)."""
    raw = {}
    k_lstm = 1.0 / math.sqrt(HID_DIM)
    for l in range(NUM_LAYER):
        d_in = INPUT_DIM if l == 0 else HID_DIM
        key, k1, k2, k3, k4 = jax.random.split(key, 5)
        raw[f"w_ih_l{l}"] = jax.random.uniform(
            k1, (4 * HID_DIM, d_in), jnp.float32, -k_lstm, k_lstm)
        raw[f"w_hh_l{l}"] = jax.random.uniform(
            k2, (4 * HID_DIM, HID_DIM), jnp.float32, -k_lstm, k_lstm)
        raw[f"b_ih_l{l}"] = jax.random.uniform(
            k3, (4 * HID_DIM,), jnp.float32, -k_lstm, k_lstm)
        raw[f"b_hh_l{l}"] = jax.random.uniform(
            k4, (4 * HID_DIM,), jnp.float32, -k_lstm, k_lstm)
    half = HID_DIM // 2
    key, k1, k2, k3, k4 = jax.random.split(key, 5)
    k_fc2 = 1.0 / math.sqrt(HID_DIM)
    raw["fc2_w"] = jax.random.uniform(k1, (half, HID_DIM), jnp.float32, -k_fc2, k_fc2)
    raw["fc2_b"] = jax.random.uniform(k2, (half,), jnp.float32, -k_fc2, k_fc2)
    k_fc3 = 1.0 / math.sqrt(half)
    raw["fc3_w"] = jax.random.uniform(k3, (OUTPUT_DIM, half), jnp.float32, -k_fc3, k_fc3)
    raw["fc3_b"] = jax.random.uniform(k4, (OUTPUT_DIM,), jnp.float32, -k_fc3, k_fc3)
    return raw


def pack_params(raw):
    """PyTorch layout -> fused kernel layout.

    Wide gate-column order (width H each): [i0, i1, f0, f1, o0, o1, g0, g1]
    so that the carried [h0|h1] / [c0|c1] lane-concat feeds the fused matmul
    directly and one sigmoid / one tanh cover both layers.
    """
    H = HID_DIM

    def gate_cols(w_t):   # w_t: (K, 4H), PyTorch gate order [i, f, g, o]
        return (w_t[:, 0:H], w_t[:, H:2 * H], w_t[:, 2 * H:3 * H], w_t[:, 3 * H:4 * H])

    wih0_i, wih0_f, wih0_g, wih0_o = gate_cols(raw["w_ih_l0"].T)   # (D, H)
    whh0_i, whh0_f, whh0_g, whh0_o = gate_cols(raw["w_hh_l0"].T)   # (H, H)
    wih1_i, wih1_f, wih1_g, wih1_o = gate_cols(raw["w_ih_l1"].T)   # (H, H)
    whh1_i, whh1_f, whh1_g, whh1_o = gate_cols(raw["w_hh_l1"].T)   # (H, H)

    D = raw["w_ih_l0"].shape[1]
    zDH = jnp.zeros((D, H), jnp.float32)
    zHH = jnp.zeros((H, H), jnp.float32)

    # Layer-0 input projection scattered into its wide columns.
    w0_wide = jnp.concatenate(
        [wih0_i, zDH, wih0_f, zDH, wih0_o, zDH, wih0_g, zDH], axis=1)   # (D, 8H)

    # Fused recurrent weight: K rows [0:H] multiply h0, rows [H:2H] multiply h1.
    w_rec_top = jnp.concatenate(
        [whh0_i, wih1_i, whh0_f, wih1_f, whh0_o, wih1_o, whh0_g, wih1_g], axis=1)
    w_rec_bot = jnp.concatenate(
        [zHH, whh1_i, zHH, whh1_f, zHH, whh1_o, zHH, whh1_g], axis=1)
    w_rec = jnp.concatenate([w_rec_top, w_rec_bot], axis=0)             # (2H, 8H)

    def gate_vec(b):
        return (b[0:H], b[H:2 * H], b[2 * H:3 * H], b[3 * H:4 * H])

    b0_i, b0_f, b0_g, b0_o = gate_vec(raw["b_ih_l0"] + raw["b_hh_l0"])
    b1_i, b1_f, b1_g, b1_o = gate_vec(raw["b_ih_l1"] + raw["b_hh_l1"])
    b_all = jnp.concatenate(
        [b0_i, b1_i, b0_f, b1_f, b0_o, b1_o, b0_g, b1_g]).reshape(1, 8 * H)

    return {
        "w0_wide": w0_wide, "w_rec": w_rec, "b_all": b_all,
        "fc2_w": raw["fc2_w"].T, "fc2_b": raw["fc2_b"].reshape(1, -1),
        "fc3_w": raw["fc3_w"].T, "fc3_b": raw["fc3_b"].reshape(1, -1),
    }


# ---- pure-JAX reference (PyTorch semantics, for sanity check only) ----------
def _reference_forward(raw, x, h0, c0):
    H = HID_DIM

    def layer(x_tbd, w_ih, w_hh, b_ih, b_hh, h, c):
        outs = []
        for t in range(x_tbd.shape[0]):
            gates = x_tbd[t] @ w_ih.T + b_ih + h @ w_hh.T + b_hh
            i = jax.nn.sigmoid(gates[:, 0 * H:1 * H])
            f = jax.nn.sigmoid(gates[:, 1 * H:2 * H])
            g = jnp.tanh(gates[:, 2 * H:3 * H])
            o = jax.nn.sigmoid(gates[:, 3 * H:4 * H])
            c = f * c + i * g
            h = o * jnp.tanh(c)
            outs.append(h)
        return jnp.stack(outs), h, c

    cur = jnp.transpose(x, (1, 0, 2))
    hs, cs = [], []
    for l in range(NUM_LAYER):
        cur, hN, cN = layer(cur, raw[f"w_ih_l{l}"], raw[f"w_hh_l{l}"],
                            raw[f"b_ih_l{l}"], raw[f"b_hh_l{l}"], h0[l], c0[l])
        hs.append(hN)
        cs.append(cN)
    out = jnp.transpose(cur, (1, 0, 2))[:, -LAST_T:, :].reshape(-1, H)
    out = jnp.maximum(out @ raw["fc2_w"].T + raw["fc2_b"], 0.0)
    out = out @ raw["fc3_w"].T + raw["fc3_b"]
    return out, (jnp.stack(hs), jnp.stack(cs))


if __name__ == "__main__":
    key = jax.random.PRNGKey(0)
    key, kx = jax.random.split(key)
    raw = init_raw_params(key)
    kparams = pack_params(raw)

    x = jax.random.normal(kx, (BATCH, SEQ_LEN, INPUT_DIM), jnp.float32)
    h0 = jnp.zeros((NUM_LAYER, BATCH, HID_DIM), jnp.float32)
    c0 = jnp.zeros((NUM_LAYER, BATCH, HID_DIM), jnp.float32)

    y, (hN, cN) = net_lstm_forward(kparams, x, h0, c0)
    y = jax.block_until_ready(y)
    hN = jax.block_until_ready(hN)
    cN = jax.block_until_ready(cN)

    y_ref, (hN_ref, cN_ref) = _reference_forward(raw, x, h0, c0)
    LT = min(LAST_T, SEQ_LEN)
    assert y.shape == (BATCH * LT, OUTPUT_DIM)
    assert hN.shape == (NUM_LAYER, BATCH, HID_DIM)
    assert cN.shape == (NUM_LAYER, BATCH, HID_DIM)
    assert jnp.allclose(y, y_ref, atol=1e-3, rtol=1e-3)
    assert jnp.allclose(hN, hN_ref, atol=1e-3, rtol=1e-3)
    assert jnp.allclose(cN, cN_ref, atol=1e-3, rtol=1e-3)

    print("KERNEL_OK")
</pallas_src>

<mosaic_0001>
module attributes {stable_mosaic.version = 11 : i64} {
  func.func @_fused_netlstm_kernel(%arg0: i32, %arg1: memref<1x96x8xf32, #tpu.memory_space<vmem>>, %arg2: memref<8x256xf32, #tpu.memory_space<vmem>>, %arg3: memref<64x256xf32, #tpu.memory_space<vmem>>, %arg4: memref<1x256xf32, #tpu.memory_space<vmem>>, %arg5: memref<2x8x32xf32, #tpu.memory_space<vmem>>, %arg6: memref<2x8x32xf32, #tpu.memory_space<vmem>>, %arg7: memref<32x16xf32, #tpu.memory_space<vmem>>, %arg8: memref<1x16xf32, #tpu.memory_space<vmem>>, %arg9: memref<16x4xf32, #tpu.memory_space<vmem>>, %arg10: memref<1x4xf32, #tpu.memory_space<vmem>>, %arg11: memref<1x80x4xf32, #tpu.memory_space<vmem>>, %arg12: memref<2x8x32xf32, #tpu.memory_space<vmem>>, %arg13: memref<2x8x32xf32, #tpu.memory_space<vmem>>) attributes {dimension_semantics = [#tpu.dimension_semantics<parallel>], iteration_bounds = array<i64: 1>, scalar_prefetch = 0 : i64, scratch_operands = 0 : i64, tpu.core_type = #tpu.core_type<tc>, window_params = [{transform_indices = @transform_0, window_bounds = array<i64: 1, 96, 8>}, {pipeline_mode = #tpu.pipeline_mode<synchronous>, transform_indices = @transform_1, window_bounds = array<i64: 8, 256>}, {pipeline_mode = #tpu.pipeline_mode<synchronous>, transform_indices = @transform_2, window_bounds = array<i64: 64, 256>}, {pipeline_mode = #tpu.pipeline_mode<synchronous>, transform_indices = @transform_3, window_bounds = array<i64: 1, 256>}, {transform_indices = @transform_4, window_bounds = array<i64: 2, 8, 32>}, {transform_indices = @transform_5, window_bounds = array<i64: 2, 8, 32>}, {pipeline_mode = #tpu.pipeline_mode<synchronous>, transform_indices = @transform_6, window_bounds = array<i64: 32, 16>}, {pipeline_mode = #tpu.pipeline_mode<synchronous>, transform_indices = @transform_7, window_bounds = array<i64: 1, 16>}, {pipeline_mode = #tpu.pipeline_mode<synchronous>, transform_indices = @transform_8, window_bounds = array<i64: 16, 4>}, {pipeline_mode = #tpu.pipeline_mode<synchronous>, transform_indices = @transform_9, window_bounds = array<i64: 1, 4>}, {transform_indices = @transform_10, window_bounds = array<i64: 1, 80, 4>}, {transform_indices = @transform_11, window_bounds = array<i64: 2, 8, 32>}, {transform_indices = @transform_12, window_bounds = array<i64: 2, 8, 32>}]} {
    %c0 = arith.constant 0 : index
    %c0_0 = arith.constant 0 : index
    %0 = vector.load %arg3[%c0, %c0_0] : memref<64x256xf32, #tpu.memory_space<vmem>>, vector<64x256xf32>
    %c0_1 = arith.constant 0 : index
    %c0_2 = arith.constant 0 : index
    %1 = vector.load %arg7[%c0_1, %c0_2] : memref<32x16xf32, #tpu.memory_space<vmem>>, vector<32x16xf32>
    %c0_3 = arith.constant 0 : index
    %c0_4 = arith.constant 0 : index
    %2 = vector.load %arg8[%c0_3, %c0_4] : memref<1x16xf32, #tpu.memory_space<vmem>>, vector<1x16xf32>
    %c0_5 = arith.constant 0 : index
    %c0_6 = arith.constant 0 : index
    %3 = vector.load %arg9[%c0_5, %c0_6] : memref<16x4xf32, #tpu.memory_space<vmem>>, vector<16x4xf32>
    %c0_7 = arith.constant 0 : index
    %c0_8 = arith.constant 0 : index
    %4 = vector.load %arg10[%c0_7, %c0_8] : memref<1x4xf32, #tpu.memory_space<vmem>>, vector<1x4xf32>
    %c0_9 = arith.constant 0 : index
    %c0_10 = arith.constant 0 : index
    %c0_11 = arith.constant 0 : index
    %5 = vector.load %arg1[%c0_9, %c0_10, %c0_11] : memref<1x96x8xf32, #tpu.memory_space<vmem>>, vector<1x96x8xf32>
    %6 = vector.shape_cast %5 : vector<1x96x8xf32> to vector<96x8xf32>
    %c0_12 = arith.constant 0 : index
    %c0_13 = arith.constant 0 : index
    %7 = vector.load %arg2[%c0_12, %c0_13] : memref<8x256xf32, #tpu.memory_space<vmem>>, vector<8x256xf32>
    %cst = arith.constant dense<0.000000e+00> : vector<96x256xf32>
    %8 = tpu.matmul %6, %7, %cst {dimension_numbers = #tpu.dot_dimension_numbers<[1], [0], [0], [1], [0, 0, 1, 1], [], []>} : vector<96x8xf32>, vector<8x256xf32>, vector<96x256xf32> -> vector<96x256xf32>
    %c0_14 = arith.constant 0 : index
    %c0_15 = arith.constant 0 : index
    %9 = vector.load %arg4[%c0_14, %c0_15] : memref<1x256xf32, #tpu.memory_space<vmem>>, vector<1x256xf32>
    %10 = vector.broadcast %9 : vector<1x256xf32> to vector<96x256xf32>
    %11 = arith.addf %8, %10 : vector<96x256xf32>
    %c1 = arith.constant 1 : index
    %c0_16 = arith.constant 0 : index
    %c0_17 = arith.constant 0 : index
    %12 = vector.load %arg5[%c1, %c0_16, %c0_17] : memref<2x8x32xf32, #tpu.memory_space<vmem>>, vector<1x8x32xf32>
    %13 = vector.shape_cast %12 : vector<1x8x32xf32> to vector<8x32xf32>
    %c1_18 = arith.constant 1 : index
    %c0_19 = arith.constant 0 : index
    %c0_20 = arith.constant 0 : index
    %14 = vector.load %arg6[%c1_18, %c0_19, %c0_20] : memref<2x8x32xf32, #tpu.memory_space<vmem>>, vector<1x8x32xf32>
    %15 = vector.shape_cast %14 : vector<1x8x32xf32> to vector<8x32xf32>
    %c0_21 = arith.constant 0 : index
    %c0_22 = arith.constant 0 : index
    %c0_23 = arith.constant 0 : index
    %16 = vector.load %arg5[%c0_21, %c0_22, %c0_23] : memref<2x8x32xf32, #tpu.memory_space<vmem>>, vector<1x8x32xf32>
    %17 = vector.shape_cast %16 : vector<1x8x32xf32> to vector<8x32xf32>
    %18 = tpu.concatenate %17, %13 in 1 : vector<8x32xf32>, vector<8x32xf32> -> vector<8x64xf32>
    %c0_24 = arith.constant 0 : index
    %c0_25 = arith.constant 0 : index
    %c0_26 = arith.constant 0 : index
    %19 = vector.load %arg6[%c0_24, %c0_25, %c0_26] : memref<2x8x32xf32, #tpu.memory_space<vmem>>, vector<1x8x32xf32>
    %20 = vector.shape_cast %19 : vector<1x8x32xf32> to vector<8x32xf32>
    %21 = tpu.concatenate %20, %15 in 1 : vector<8x32xf32>, vector<8x32xf32> -> vector<8x64xf32>
    %cst_27 = arith.constant dense<0.000000e+00> : vector<8x256xf32>
    %22 = tpu.matmul %18, %0, %cst_27 {dimension_numbers = #tpu.dot_dimension_numbers<[1], [0], [0], [1], [0, 0, 1, 1], [], []>} : vector<8x64xf32>, vector<64x256xf32>, vector<8x256xf32> -> vector<8x256xf32>
    %23 = vector.extract_strided_slice %11 {offsets = [0, 0], sizes = [8, 256], strides = [1, 1]} : vector<96x256xf32> to vector<8x256xf32>
    %24 = arith.addf %22, %23 : vector<8x256xf32>
    %25 = arith.negf %24 : vector<8x256xf32>
    %26 = math.exp %25 : vector<8x256xf32>
    %cst_28 = arith.constant 1.000000e+00 : f32
    %27 = vector.broadcast %cst_28 : f32 to vector<8x256xf32>
    %28 = arith.addf %27, %26 : vector<8x256xf32>
    %29 = arith.divf %27, %28 : vector<8x256xf32>
    %30 = vector.extract_strided_slice %29 {offsets = [0, 0], sizes = [8, 64], strides = [1, 1]} : vector<8x256xf32> to vector<8x64xf32>
    %31 = vector.extract_strided_slice %29 {offsets = [0, 64], sizes = [8, 64], strides = [1, 1]} : vector<8x256xf32> to vector<8x64xf32>
    %32 = vector.extract_strided_slice %29 {offsets = [0, 128], sizes = [8, 64], strides = [1, 1]} : vector<8x256xf32> to vector<8x64xf32>
    %33 = vector.extract_strided_slice %24 {offsets = [0, 192], sizes = [8, 64], strides = [1, 1]} : vector<8x256xf32> to vector<8x64xf32>
    %34 = math.tanh %33 : vector<8x64xf32>
    %35 = arith.mulf %31, %21 : vector<8x64xf32>
    %36 = arith.mulf %30, %34 : vector<8x64xf32>
    %37 = arith.addf %35, %36 : vector<8x64xf32>
    %38 = math.tanh %37 : vector<8x64xf32>
    %39 = arith.mulf %32, %38 : vector<8x64xf32>
    %40 = vector.extract_strided_slice %39 {offsets = [0, 0], sizes = [8, 32], strides = [1, 1]} : vector<8x64xf32> to vector<8x32xf32>
    %41 = tpu.concatenate %40, %13 in 1 : vector<8x32xf32>, vector<8x32xf32> -> vector<8x64xf32>
    %42 = vector.extract_strided_slice %37 {offsets = [0, 0], sizes = [8, 32], strides = [1, 1]} : vector<8x64xf32> to vector<8x32xf32>
    %43 = tpu.concatenate %42, %15 in 1 : vector<8x32xf32>, vector<8x32xf32> -> vector<8x64xf32>
    %cst_29 = arith.constant dense<0.000000e+00> : vector<8x256xf32>
    %44 = tpu.matmul %41, %0, %cst_29 {dimension_numbers = #tpu.dot_dimension_numbers<[1], [0], [0], [1], [0, 0, 1, 1], [], []>} : vector<8x64xf32>, vector<64x256xf32>, vector<8x256xf32> -> vector<8x256xf32>
    %45 = vector.extract_strided_slice %11 {offsets = [8, 0], sizes = [8, 256], strides = [1, 1]} : vector<96x256xf32> to vector<8x256xf32>
    %46 = arith.addf %44, %45 : vector<8x256xf32>
    %47 = arith.negf %46 : vector<8x256xf32>
    %48 = math.exp %47 : vector<8x256xf32>
    %cst_30 = arith.constant 1.000000e+00 : f32
    %49 = vector.broadcast %cst_30 : f32 to vector<8x256xf32>
    %50 = arith.addf %49, %48 : vector<8x256xf32>
    %51 = arith.divf %49, %50 : vector<8x256xf32>
    %52 = vector.extract_strided_slice %51 {offsets = [0, 0], sizes = [8, 64], strides = [1, 1]} : vector<8x256xf32> to vector<8x64xf32>
    %53 = vector.extract_strided_slice %51 {offsets = [0, 64], sizes = [8, 64], strides = [1, 1]} : vector<8x256xf32> to vector<8x64xf32>
    %54 = vector.extract_strided_slice %51 {offsets = [0, 128], sizes = [8, 64], strides = [1, 1]} : vector<8x256xf32> to vector<8x64xf32>
    %55 = vector.extract_strided_slice %46 {offsets = [0, 192], sizes = [8, 64], strides = [1, 1]} : vector<8x256xf32> to vector<8x64xf32>
    %56 = math.tanh %55 : vector<8x64xf32>
    %57 = arith.mulf %53, %43 : vector<8x64xf32>
    %58 = arith.mulf %52, %56 : vector<8x64xf32>
    %59 = arith.addf %57, %58 : vector<8x64xf32>
    %60 = math.tanh %59 : vector<8x64xf32>
    %61 = arith.mulf %54, %60 : vector<8x64xf32>
    %cst_31 = arith.constant dense<0.000000e+00> : vector<8x256xf32>
    %62 = tpu.matmul %61, %0, %cst_31 {dimension_numbers = #tpu.dot_dimension_numbers<[1], [0], [0], [1], [0, 0, 1, 1], [], []>} : vector<8x64xf32>, vector<64x256xf32>, vector<8x256xf32> -> vector<8x256xf32>
    %63 = vector.extract_strided_slice %11 {offsets = [16, 0], sizes = [8, 256], strides = [1, 1]} : vector<96x256xf32> to vector<8x256xf32>
    %64 = arith.addf %62, %63 : vector<8x256xf32>
    %65 = arith.negf %64 : vector<8x256xf32>
    %66 = math.exp %65 : vector<8x256xf32>
    %cst_32 = arith.constant 1.000000e+00 : f32
    %67 = vector.broadcast %cst_32 : f32 to vector<8x256xf32>
    %68 = arith.addf %67, %66 : vector<8x256xf32>
    %69 = arith.divf %67, %68 : vector<8x256xf32>
    %70 = vector.extract_strided_slice %69 {offsets = [0, 0], sizes = [8, 64], strides = [1, 1]} : vector<8x256xf32> to vector<8x64xf32>
    %71 = vector.extract_strided_slice %69 {offsets = [0, 64], sizes = [8, 64], strides = [1, 1]} : vector<8x256xf32> to vector<8x64xf32>
    %72 = vector.extract_strided_slice %69 {offsets = [0, 128], sizes = [8, 64], strides = [1, 1]} : vector<8x256xf32> to vector<8x64xf32>
    %73 = vector.extract_strided_slice %64 {offsets = [0, 192], sizes = [8, 64], strides = [1, 1]} : vector<8x256xf32> to vector<8x64xf32>
    %74 = math.tanh %73 : vector<8x64xf32>
    %75 = arith.mulf %71, %59 : vector<8x64xf32>
    %76 = arith.mulf %70, %74 : vector<8x64xf32>
    %77 = arith.addf %75, %76 : vector<8x64xf32>
    %78 = math.tanh %77 : vector<8x64xf32>
    %79 = arith.mulf %72, %78 : vector<8x64xf32>
    %cst_33 = arith.constant dense<0.000000e+00> : vector<8x256xf32>
    %80 = tpu.matmul %79, %0, %cst_33 {dimension_numbers = #tpu.dot_dimension_numbers<[1], [0], [0], [1], [0, 0, 1, 1], [], []>} : vector<8x64xf32>, vector<64x256xf32>, vector<8x256xf32> -> vector<8x256xf32>
    %81 = vector.extract_strided_slice %11 {offsets = [24, 0], sizes = [8, 256], strides = [1, 1]} : vector<96x256xf32> to vector<8x256xf32>
    %82 = arith.addf %80, %81 : vector<8x256xf32>
    %83 = arith.negf %82 : vector<8x256xf32>
    %84 = math.exp %83 : vector<8x256xf32>
    %cst_34 = arith.constant 1.000000e+00 : f32
    %85 = vector.broadcast %cst_34 : f32 to vector<8x256xf32>
    %86 = arith.addf %85, %84 : vector<8x256xf32>
    %87 = arith.divf %85, %86 : vector<8x256xf32>
    %88 = vector.extract_strided_slice %87 {offsets = [0, 0], sizes = [8, 64], strides = [1, 1]} : vector<8x256xf32> to vector<8x64xf32>
    %89 = vector.extract_strided_slice %87 {offsets = [0, 64], sizes = [8, 64], strides = [1, 1]} : vector<8x256xf32> to vector<8x64xf32>
    %90 = vector.extract_strided_slice %87 {offsets = [0, 128], sizes = [8, 64], strides = [1, 1]} : vector<8x256xf32> to vector<8x64xf32>
    %91 = vector.extract_strided_slice %82 {offsets = [0, 192], sizes = [8, 64], strides = [1, 1]} : vector<8x256xf32> to vector<8x64xf32>
    %92 = math.tanh %91 : vector<8x64xf32>
    %93 = arith.mulf %89, %77 : vector<8x64xf32>
    %94 = arith.mulf %88, %92 : vector<8x64xf32>
    %95 = arith.addf %93, %94 : vector<8x64xf32>
    %96 = math.tanh %95 : vector<8x64xf32>
    %97 = arith.mulf %90, %96 : vector<8x64xf32>
    %98 = vector.extract_strided_slice %97 {offsets = [0, 32], sizes = [8, 32], strides = [1, 1]} : vector<8x64xf32> to vector<8x32xf32>
    %cst_35 = arith.constant dense<0.000000e+00> : vector<8x256xf32>
    %99 = tpu.matmul %97, %0, %cst_35 {dimension_numbers = #tpu.dot_dimension_numbers<[1], [0], [0], [1], [0, 0, 1, 1], [], []>} : vector<8x64xf32>, vector<64x256xf32>, vector<8x256xf32> -> vector<8x256xf32>
    %100 = vector.extract_strided_slice %11 {offsets = [32, 0], sizes = [8, 256], strides = [1, 1]} : vector<96x256xf32> to vector<8x256xf32>
    %101 = arith.addf %99, %100 : vector<8x256xf32>
    %102 = arith.negf %101 : vector<8x256xf32>
    %103 = math.exp %102 : vector<8x256xf32>
    %cst_36 = arith.constant 1.000000e+00 : f32
    %104 = vector.broadcast %cst_36 : f32 to vector<8x256xf32>
    %105 = arith.addf %104, %103 : vector<8x256xf32>
    %106 = arith.divf %104, %105 : vector<8x256xf32>
    %107 = vector.extract_strided_slice %106 {offsets = [0, 0], sizes = [8, 64], strides = [1, 1]} : vector<8x256xf32> to vector<8x64xf32>
    %108 = vector.extract_strided_slice %106 {offsets = [0, 64], sizes = [8, 64], strides = [1, 1]} : vector<8x256xf32> to vector<8x64xf32>
    %109 = vector.extract_strided_slice %106 {offsets = [0, 128], sizes = [8, 64], strides = [1, 1]} : vector<8x256xf32> to vector<8x64xf32>
    %110 = vector.extract_strided_slice %101 {offsets = [0, 192], sizes = [8, 64], strides = [1, 1]} : vector<8x256xf32> to vector<8x64xf32>
    %111 = math.tanh %110 : vector<8x64xf32>
    %112 = arith.mulf %108, %95 : vector<8x64xf32>
    %113 = arith.mulf %107, %111 : vector<8x64xf32>
    %114 = arith.addf %112, %113 : vector<8x64xf32>
    %115 = math.tanh %114 : vector<8x64xf32>
    %116 = arith.mulf %109, %115 : vector<8x64xf32>
    %117 = vector.extract_strided_slice %116 {offsets = [0, 32], sizes = [8, 32], strides = [1, 1]} : vector<8x64xf32> to vector<8x32xf32>
    %cst_37 = arith.constant dense<0.000000e+00> : vector<8x256xf32>
    %118 = tpu.matmul %116, %0, %cst_37 {dimension_numbers = #tpu.dot_dimension_numbers<[1], [0], [0], [1], [0, 0, 1, 1], [], []>} : vector<8x64xf32>, vector<64x256xf32>, vector<8x256xf32> -> vector<8x256xf32>
    %119 = vector.extract_strided_slice %11 {offsets = [40, 0], sizes = [8, 256], strides = [1, 1]} : vector<96x256xf32> to vector<8x256xf32>
    %120 = arith.addf %118, %119 : vector<8x256xf32>
    %121 = arith.negf %120 : vector<8x256xf32>
    %122 = math.exp %121 : vector<8x256xf32>
    %cst_38 = arith.constant 1.000000e+00 : f32
    %123 = vector.broadcast %cst_38 : f32 to vector<8x256xf32>
    %124 = arith.addf %123, %122 : vector<8x256xf32>
    %125 = arith.divf %123, %124 : vector<8x256xf32>
    %126 = vector.extract_strided_slice %125 {offsets = [0, 0], sizes = [8, 64], strides = [1, 1]} : vector<8x256xf32> to vector<8x64xf32>
    %127 = vector.extract_strided_slice %125 {offsets = [0, 64], sizes = [8, 64], strides = [1, 1]} : vector<8x256xf32> to vector<8x64xf32>
    %128 = vector.extract_strided_slice %125 {offsets = [0, 128], sizes = [8, 64], strides = [1, 1]} : vector<8x256xf32> to vector<8x64xf32>
    %129 = vector.extract_strided_slice %120 {offsets = [0, 192], sizes = [8, 64], strides = [1, 1]} : vector<8x256xf32> to vector<8x64xf32>
    %130 = math.tanh %129 : vector<8x64xf32>
    %131 = arith.mulf %127, %114 : vector<8x64xf32>
    %132 = arith.mulf %126, %130 : vector<8x64xf32>
    %133 = arith.addf %131, %132 : vector<8x64xf32>
    %134 = math.tanh %133 : vector<8x64xf32>
    %135 = arith.mulf %128, %134 : vector<8x64xf32>
    %136 = vector.extract_strided_slice %135 {offsets = [0, 32], sizes = [8, 32], strides = [1, 1]} : vector<8x64xf32> to vector<8x32xf32>
    %cst_39 = arith.constant dense<0.000000e+00> : vector<8x256xf32>
    %137 = tpu.matmul %135, %0, %cst_39 {dimension_numbers = #tpu.dot_dimension_numbers<[1], [0], [0], [1], [0, 0, 1, 1], [], []>} : vector<8x64xf32>, vector<64x256xf32>, vector<8x256xf32> -> vector<8x256xf32>
    %138 = vector.extract_strided_slice %11 {offsets = [48, 0], sizes = [8, 256], strides = [1, 1]} : vector<96x256xf32> to vector<8x256xf32>
    %139 = arith.addf %137, %138 : vector<8x256xf32>
    %140 = arith.negf %139 : vector<8x256xf32>
    %141 = math.exp %140 : vector<8x256xf32>
    %cst_40 = arith.constant 1.000000e+00 : f32
    %142 = vector.broadcast %cst_40 : f32 to vector<8x256xf32>
    %143 = arith.addf %142, %141 : vector<8x256xf32>
    %144 = arith.divf %142, %143 : vector<8x256xf32>
    %145 = vector.extract_strided_slice %144 {offsets = [0, 0], sizes = [8, 64], strides = [1, 1]} : vector<8x256xf32> to vector<8x64xf32>
    %146 = vector.extract_strided_slice %144 {offsets = [0, 64], sizes = [8, 64], strides = [1, 1]} : vector<8x256xf32> to vector<8x64xf32>
    %147 = vector.extract_strided_slice %144 {offsets = [0, 128], sizes = [8, 64], strides = [1, 1]} : vector<8x256xf32> to vector<8x64xf32>
    %148 = vector.extract_strided_slice %139 {offsets = [0, 192], sizes = [8, 64], strides = [1, 1]} : vector<8x256xf32> to vector<8x64xf32>
    %149 = math.tanh %148 : vector<8x64xf32>
    %150 = arith.mulf %146, %133 : vector<8x64xf32>
    %151 = arith.mulf %145, %149 : vector<8x64xf32>
    %152 = arith.addf %150, %151 : vector<8x64xf32>
    %153 = math.tanh %152 : vector<8x64xf32>
    %154 = arith.mulf %147, %153 : vector<8x64xf32>
    %155 = vector.extract_strided_slice %154 {offsets = [0, 32], sizes = [8, 32], strides = [1, 1]} : vector<8x64xf32> to vector<8x32xf32>
    %cst_41 = arith.constant dense<0.000000e+00> : vector<8x256xf32>
    %156 = tpu.matmul %154, %0, %cst_41 {dimension_numbers = #tpu.dot_dimension_numbers<[1], [0], [0], [1], [0, 0, 1, 1], [], []>} : vector<8x64xf32>, vector<64x256xf32>, vector<8x256xf32> -> vector<8x256xf32>
    %157 = vector.extract_strided_slice %11 {offsets = [56, 0], sizes = [8, 256], strides = [1, 1]} : vector<96x256xf32> to vector<8x256xf32>
    %158 = arith.addf %156, %157 : vector<8x256xf32>
    %159 = arith.negf %158 : vector<8x256xf32>
    %160 = math.exp %159 : vector<8x256xf32>
    %cst_42 = arith.constant 1.000000e+00 : f32
    %161 = vector.broadcast %cst_42 : f32 to vector<8x256xf32>
    %162 = arith.addf %161, %160 : vector<8x256xf32>
    %163 = arith.divf %161, %162 : vector<8x256xf32>
    %164 = vector.extract_strided_slice %163 {offsets = [0, 0], sizes = [8, 64], strides = [1, 1]} : vector<8x256xf32> to vector<8x64xf32>
    %165 = vector.extract_strided_slice %163 {offsets = [0, 64], sizes = [8, 64], strides = [1, 1]} : vector<8x256xf32> to vector<8x64xf32>
    %166 = vector.extract_strided_slice %163 {offsets = [0, 128], sizes = [8, 64], strides = [1, 1]} : vector<8x256xf32> to vector<8x64xf32>
    %167 = vector.extract_strided_slice %158 {offsets = [0, 192], sizes = [8, 64], strides = [1, 1]} : vector<8x256xf32> to vector<8x64xf32>
    %168 = math.tanh %167 : vector<8x64xf32>
    %169 = arith.mulf %165, %152 : vector<8x64xf32>
    %170 = arith.mulf %164, %168 : vector<8x64xf32>
    %171 = arith.addf %169, %170 : vector<8x64xf32>
    %172 = math.tanh %171 : vector<8x64xf32>
    %173 = arith.mulf %166, %172 : vector<8x64xf32>
    %174 = vector.extract_strided_slice %173 {offsets = [0, 32], sizes = [8, 32], strides = [1, 1]} : vector<8x64xf32> to vector<8x32xf32>
    %cst_43 = arith.constant dense<0.000000e+00> : vector<8x256xf32>
    %175 = tpu.matmul %173, %0, %cst_43 {dimension_numbers = #tpu.dot_dimension_numbers<[1], [0], [0], [1], [0, 0, 1, 1], [], []>} : vector<8x64xf32>, vector<64x256xf32>, vector<8x256xf32> -> vector<8x256xf32>
    %176 = vector.extract_strided_slice %11 {offsets = [64, 0], sizes = [8, 256], strides = [1, 1]} : vector<96x256xf32> to vector<8x256xf32>
    %177 = arith.addf %175, %176 : vector<8x256xf32>
    %178 = arith.negf %177 : vector<8x256xf32>
    %179 = math.exp %178 : vector<8x256xf32>
    %cst_44 = arith.constant 1.000000e+00 : f32
    %180 = vector.broadcast %cst_44 : f32 to vector<8x256xf32>
    %181 = arith.addf %180, %179 : vector<8x256xf32>
    %182 = arith.divf %180, %181 : vector<8x256xf32>
    %183 = vector.extract_strided_slice %182 {offsets = [0, 0], sizes = [8, 64], strides = [1, 1]} : vector<8x256xf32> to vector<8x64xf32>
    %184 = vector.extract_strided_slice %182 {offsets = [0, 64], sizes = [8, 64], strides = [1, 1]} : vector<8x256xf32> to vector<8x64xf32>
    %185 = vector.extract_strided_slice %182 {offsets = [0, 128], sizes = [8, 64], strides = [1, 1]} : vector<8x256xf32> to vector<8x64xf32>
    %186 = vector.extract_strided_slice %177 {offsets = [0, 192], sizes = [8, 64], strides = [1, 1]} : vector<8x256xf32> to vector<8x64xf32>
    %187 = math.tanh %186 : vector<8x64xf32>
    %188 = arith.mulf %184, %171 : vector<8x64xf32>
    %189 = arith.mulf %183, %187 : vector<8x64xf32>
    %190 = arith.addf %188, %189 : vector<8x64xf32>
    %191 = math.tanh %190 : vector<8x64xf32>
    %192 = arith.mulf %185, %191 : vector<8x64xf32>
    %193 = vector.extract_strided_slice %192 {offsets = [0, 32], sizes = [8, 32], strides = [1, 1]} : vector<8x64xf32> to vector<8x32xf32>
    %cst_45 = arith.constant dense<0.000000e+00> : vector<8x256xf32>
    %194 = tpu.matmul %192, %0, %cst_45 {dimension_numbers = #tpu.dot_dimension_numbers<[1], [0], [0], [1], [0, 0, 1, 1], [], []>} : vector<8x64xf32>, vector<64x256xf32>, vector<8x256xf32> -> vector<8x256xf32>
    %195 = vector.extract_strided_slice %11 {offsets = [72, 0], sizes = [8, 256], strides = [1, 1]} : vector<96x256xf32> to vector<8x256xf32>
    %196 = arith.addf %194, %195 : vector<8x256xf32>
    %197 = arith.negf %196 : vector<8x256xf32>
    %198 = math.exp %197 : vector<8x256xf32>
    %cst_46 = arith.constant 1.000000e+00 : f32
    %199 = vector.broadcast %cst_46 : f32 to vector<8x256xf32>
    %200 = arith.addf %199, %198 : vector<8x256xf32>
    %201 = arith.divf %199, %200 : vector<8x256xf32>
    %202 = vector.extract_strided_slice %201 {offsets = [0, 0], sizes = [8, 64], strides = [1, 1]} : vector<8x256xf32> to vector<8x64xf32>
    %203 = vector.extract_strided_slice %201 {offsets = [0, 64], sizes = [8, 64], strides = [1, 1]} : vector<8x256xf32> to vector<8x64xf32>
    %204 = vector.extract_strided_slice %201 {offsets = [0, 128], sizes = [8, 64], strides = [1, 1]} : vector<8x256xf32> to vector<8x64xf32>
    %205 = vector.extract_strided_slice %196 {offsets = [0, 192], sizes = [8, 64], strides = [1, 1]} : vector<8x256xf32> to vector<8x64xf32>
    %206 = math.tanh %205 : vector<8x64xf32>
    %207 = arith.mulf %203, %190 : vector<8x64xf32>
    %208 = arith.mulf %202, %206 : vector<8x64xf32>
    %209 = arith.addf %207, %208 : vector<8x64xf32>
    %210 = math.tanh %209 : vector<8x64xf32>
    %211 = arith.mulf %204, %210 : vector<8x64xf32>
    %212 = vector.extract_strided_slice %211 {offsets = [0, 32], sizes = [8, 32], strides = [1, 1]} : vector<8x64xf32> to vector<8x32xf32>
    %cst_47 = arith.constant dense<0.000000e+00> : vector<8x256xf32>
    %213 = tpu.matmul %211, %0, %cst_47 {dimension_numbers = #tpu.dot_dimension_numbers<[1], [0], [0], [1], [0, 0, 1, 1], [], []>} : vector<8x64xf32>, vector<64x256xf32>, vector<8x256xf32> -> vector<8x256xf32>
    %214 = vector.extract_strided_slice %11 {offsets = [80, 0], sizes = [8, 256], strides = [1, 1]} : vector<96x256xf32> to vector<8x256xf32>
    %215 = arith.addf %213, %214 : vector<8x256xf32>
    %216 = arith.negf %215 : vector<8x256xf32>
    %217 = math.exp %216 : vector<8x256xf32>
    %cst_48 = arith.constant 1.000000e+00 : f32
    %218 = vector.broadcast %cst_48 : f32 to vector<8x256xf32>
    %219 = arith.addf %218, %217 : vector<8x256xf32>
    %220 = arith.divf %218, %219 : vector<8x256xf32>
    %221 = vector.extract_strided_slice %220 {offsets = [0, 0], sizes = [8, 64], strides = [1, 1]} : vector<8x256xf32> to vector<8x64xf32>
    %222 = vector.extract_strided_slice %220 {offsets = [0, 64], sizes = [8, 64], strides = [1, 1]} : vector<8x256xf32> to vector<8x64xf32>
    %223 = vector.extract_strided_slice %220 {offsets = [0, 128], sizes = [8, 64], strides = [1, 1]} : vector<8x256xf32> to vector<8x64xf32>
    %224 = vector.extract_strided_slice %215 {offsets = [0, 192], sizes = [8, 64], strides = [1, 1]} : vector<8x256xf32> to vector<8x64xf32>
    %225 = math.tanh %224 : vector<8x64xf32>
    %226 = arith.mulf %222, %209 : vector<8x64xf32>
    %227 = arith.mulf %221, %225 : vector<8x64xf32>
    %228 = arith.addf %226, %227 : vector<8x64xf32>
    %229 = math.tanh %228 : vector<8x64xf32>
    %230 = arith.mulf %223, %229 : vector<8x64xf32>
    %231 = vector.extract_strided_slice %230 {offsets = [0, 32], sizes = [8, 32], strides = [1, 1]} : vector<8x64xf32> to vector<8x32xf32>
    %cst_49 = arith.constant dense<0.000000e+00> : vector<8x256xf32>
    %232 = tpu.matmul %230, %0, %cst_49 {dimension_numbers = #tpu.dot_dimension_numbers<[1], [0], [0], [1], [0, 0, 1, 1], [], []>} : vector<8x64xf32>, vector<64x256xf32>, vector<8x256xf32> -> vector<8x256xf32>
    %233 = vector.extract_strided_slice %11 {offsets = [88, 0], sizes = [8, 256], strides = [1, 1]} : vector<96x256xf32> to vector<8x256xf32>
    %234 = arith.addf %232, %233 : vector<8x256xf32>
    %235 = arith.negf %234 : vector<8x256xf32>
    %236 = math.exp %235 : vector<8x256xf32>
    %cst_50 = arith.constant 1.000000e+00 : f32
    %237 = vector.broadcast %cst_50 : f32 to vector<8x256xf32>
    %238 = arith.addf %237, %236 : vector<8x256xf32>
    %239 = arith.divf %237, %238 : vector<8x256xf32>
    %240 = vector.extract_strided_slice %239 {offsets = [0, 0], sizes = [8, 64], strides = [1, 1]} : vector<8x256xf32> to vector<8x64xf32>
    %241 = vector.extract_strided_slice %239 {offsets = [0, 64], sizes = [8, 64], strides = [1, 1]} : vector<8x256xf32> to vector<8x64xf32>
    %242 = vector.extract_strided_slice %239 {offsets = [0, 128], sizes = [8, 64], strides = [1, 1]} : vector<8x256xf32> to vector<8x64xf32>
    %243 = vector.extract_strided_slice %234 {offsets = [0, 192], sizes = [8, 64], strides = [1, 1]} : vector<8x256xf32> to vector<8x64xf32>
    %244 = math.tanh %243 : vector<8x64xf32>
    %245 = arith.mulf %241, %228 : vector<8x64xf32>
    %246 = arith.mulf %240, %244 : vector<8x64xf32>
    %247 = arith.addf %245, %246 : vector<8x64xf32>
    %248 = math.tanh %247 : vector<8x64xf32>
    %249 = arith.mulf %242, %248 : vector<8x64xf32>
    %250 = vector.extract_strided_slice %249 {offsets = [0, 0], sizes = [8, 32], strides = [1, 1]} : vector<8x64xf32> to vector<8x32xf32>
    %c0_51 = arith.constant 0 : index
    %c0_52 = arith.constant 0 : index
    %c0_53 = arith.constant 0 : index
    %251 = vector.load %arg12[%c0_51, %c0_52, %c0_53] : memref<2x8x32xf32, #tpu.memory_space<vmem>>, vector<1x8x32xf32>
    %252 = vector.shape_cast %251 : vector<1x8x32xf32> to vector<8x32xf32>
    %253 = vector.shape_cast %250 : vector<8x32xf32> to vector<1x8x32xf32>
    tpu.vector_store %arg12[%c0_51, %c0_52, %c0_53], %253 {strides = array<i32>} : memref<2x8x32xf32, #tpu.memory_space<vmem>>, vector<1x8x32xf32>,
    %254 = vector.extract_strided_slice %247 {offsets = [0, 0], sizes = [8, 32], strides = [1, 1]} : vector<8x64xf32> to vector<8x32xf32>
    %c0_54 = arith.constant 0 : index
    %c0_55 = arith.constant 0 : index
    %c0_56 = arith.constant 0 : index
    %255 = vector.load %arg13[%c0_54, %c0_55, %c0_56] : memref<2x8x32xf32, #tpu.memory_space<vmem>>, vector<1x8x32xf32>
    %256 = vector.shape_cast %255 : vector<1x8x32xf32> to vector<8x32xf32>
    %257 = vector.shape_cast %254 : vector<8x32xf32> to vector<1x8x32xf32>
    tpu.vector_store %arg13[%c0_54, %c0_55, %c0_56], %257 {strides = array<i32>} : memref<2x8x32xf32, #tpu.memory_space<vmem>>, vector<1x8x32xf32>,
    %258 = vector.extract_strided_slice %249 {offsets = [0, 32], sizes = [8, 32], strides = [1, 1]} : vector<8x64xf32> to vector<8x32xf32>
    %cst_57 = arith.constant dense<0.000000e+00> : vector<8x256xf32>
    %259 = tpu.matmul %249, %0, %cst_57 {dimension_numbers = #tpu.dot_dimension_numbers<[1], [0], [0], [1], [0, 0, 1, 1], [], []>} : vector<8x64xf32>, vector<64x256xf32>, vector<8x256xf32> -> vector<8x256xf32>
    %260 = vector.extract_strided_slice %11 {offsets = [88, 0], sizes = [8, 256], strides = [1, 1]} : vector<96x256xf32> to vector<8x256xf32>
    %261 = arith.addf %259, %260 : vector<8x256xf32>
    %262 = arith.negf %261 : vector<8x256xf32>
    %263 = math.exp %262 : vector<8x256xf32>
    %cst_58 = arith.constant 1.000000e+00 : f32
    %264 = vector.broadcast %cst_58 : f32 to vector<8x256xf32>
    %265 = arith.addf %264, %263 : vector<8x256xf32>
    %266 = arith.divf %264, %265 : vector<8x256xf32>
    %267 = vector.extract_strided_slice %266 {offsets = [0, 0], sizes = [8, 64], strides = [1, 1]} : vector<8x256xf32> to vector<8x64xf32>
    %268 = vector.extract_strided_slice %266 {offsets = [0, 64], sizes = [8, 64], strides = [1, 1]} : vector<8x256xf32> to vector<8x64xf32>
    %269 = vector.extract_strided_slice %266 {offsets = [0, 128], sizes = [8, 64], strides = [1, 1]} : vector<8x256xf32> to vector<8x64xf32>
    %270 = vector.extract_strided_slice %261 {offsets = [0, 192], sizes = [8, 64], strides = [1, 1]} : vector<8x256xf32> to vector<8x64xf32>
    %271 = math.tanh %270 : vector<8x64xf32>
    %272 = arith.mulf %268, %247 : vector<8x64xf32>
    %273 = arith.mulf %267, %271 : vector<8x64xf32>
    %274 = arith.addf %272, %273 : vector<8x64xf32>
    %275 = math.tanh %274 : vector<8x64xf32>
    %276 = arith.mulf %269, %275 : vector<8x64xf32>
    %277 = vector.extract_strided_slice %276 {offsets = [0, 32], sizes = [8, 32], strides = [1, 1]} : vector<8x64xf32> to vector<8x32xf32>
    %278 = vector.extract_strided_slice %276 {offsets = [0, 32], sizes = [8, 32], strides = [1, 1]} : vector<8x64xf32> to vector<8x32xf32>
    %c1_59 = arith.constant 1 : index
    %c0_60 = arith.constant 0 : index
    %c0_61 = arith.constant 0 : index
    %279 = vector.load %arg12[%c1_59, %c0_60, %c0_61] : memref<2x8x32xf32, #tpu.memory_space<vmem>>, vector<1x8x32xf32>
    %280 = vector.shape_cast %279 : vector<1x8x32xf32> to vector<8x32xf32>
    %281 = vector.shape_cast %278 : vector<8x32xf32> to vector<1x8x32xf32>
    tpu.vector_store %arg12[%c1_59, %c0_60, %c0_61], %281 {strides = array<i32>} : memref<2x8x32xf32, #tpu.memory_space<vmem>>, vector<1x8x32xf32>,
    %282 = vector.extract_strided_slice %274 {offsets = [0, 32], sizes = [8, 32], strides = [1, 1]} : vector<8x64xf32> to vector<8x32xf32>
    %c1_62 = arith.constant 1 : index
    %c0_63 = arith.constant 0 : index
    %c0_64 = arith.constant 0 : index
    %283 = vector.load %arg13[%c1_62, %c0_63, %c0_64] : memref<2x8x32xf32, #tpu.memory_space<vmem>>, vector<1x8x32xf32>
    %284 = vector.shape_cast %283 : vector<1x8x32xf32> to vector<8x32xf32>
    %285 = vector.shape_cast %282 : vector<8x32xf32> to vector<1x8x32xf32>
    tpu.vector_store %arg13[%c1_62, %c0_63, %c0_64], %285 {strides = array<i32>} : memref<2x8x32xf32, #tpu.memory_space<vmem>>, vector<1x8x32xf32>,
    %286 = tpu.concatenate %98, %117, %136, %155, %174, %193, %212, %231, %258, %277 in 0 : vector<8x32xf32>, vector<8x32xf32>, vector<8x32xf32>, vector<8x32xf32>, vector<8x32xf32>, vector<8x32xf32>, vector<8x32xf32>, vector<8x32xf32>, vector<8x32xf32>, vector<8x32xf32> -> vector<80x32xf32>
    %cst_65 = arith.constant dense<0.000000e+00> : vector<80x16xf32>
    %287 = tpu.matmul %286, %1, %cst_65 {dimension_numbers = #tpu.dot_dimension_numbers<[1], [0], [0], [1], [0, 0, 1, 1], [], []>} : vector<80x32xf32>, vector<32x16xf32>, vector<80x16xf32> -> vector<80x16xf32>
    %288 = vector.broadcast %2 : vector<1x16xf32> to vector<80x16xf32>
    %289 = arith.addf %287, %288 : vector<80x16xf32>
    %cst_66 = arith.constant 0.000000e+00 : f32
    %290 = vector.broadcast %cst_66 : f32 to vector<80x16xf32>
    %291 = arith.maximumf %289, %290 : vector<80x16xf32>
    %cst_67 = arith.constant dense<0.000000e+00> : vector<80x4xf32>
    %292 = tpu.matmul %291, %3, %cst_67 {dimension_numbers = #tpu.dot_dimension_numbers<[1], [0], [0], [1], [0, 0, 1, 1], [], []>} : vector<80x16xf32>, vector<16x4xf32>, vector<80x4xf32> -> vector<80x4xf32>
    %293 = vector.broadcast %4 : vector<1x4xf32> to vector<80x4xf32>
    %294 = arith.addf %292, %293 : vector<80x4xf32>
    %c0_68 = arith.constant 0 : index
    %c0_69 = arith.constant 0 : index
    %c0_70 = arith.constant 0 : index
    %295 = vector.load %arg11[%c0_68, %c0_69, %c0_70] : memref<1x80x4xf32, #tpu.memory_space<vmem>>, vector<1x80x4xf32>
    %296 = vector.shape_cast %295 : vector<1x80x4xf32> to vector<80x4xf32>
    %297 = vector.shape_cast %294 : vector<80x4xf32> to vector<1x80x4xf32>
    tpu.vector_store %arg11[%c0_68, %c0_69, %c0_70], %297 {strides = array<i32>} : memref<1x80x4xf32, #tpu.memory_space<vmem>>, vector<1x80x4xf32>,
    return
  }
  func.func @transform_0(%arg0: i32) -> (i32, i32, i32) {
    %c0_i32 = arith.constant 0 : i32
    %c0_i32_0 = arith.constant 0 : i32
    %c0_i32_1 = arith.constant 0 : i32
    return %arg0, %c0_i32, %c0_i32_0 : i32, i32, i32
  }
  func.func @transform_1(%arg0: i32) -> (i32, i32) {
    %c0_i32 = arith.constant 0 : i32
    %c0_i32_0 = arith.constant 0 : i32
    %c0_i32_1 = arith.constant 0 : i32
    return %c0_i32, %c0_i32_0 : i32, i32
  }
  func.func @transform_2(%arg0: i32) -> (i32, i32) {
    %c0_i32 = arith.constant 0 : i32
    %c0_i32_0 = arith.constant 0 : i32
    %c0_i32_1 = arith.constant 0 : i32
    return %c0_i32, %c0_i32_0 : i32, i32
  }
  func.func @transform_3(%arg0: i32) -> (i32, i32) {
    %c0_i32 = arith.constant 0 : i32
    %c0_i32_0 = arith.constant 0 : i32
    %c0_i32_1 = arith.constant 0 : i32
    return %c0_i32, %c0_i32_0 : i32, i32
  }
  func.func @transform_4(%arg0: i32) -> (i32, i32, i32) {
    %c0_i32 = arith.constant 0 : i32
    %c0_i32_0 = arith.constant 0 : i32
    %c0_i32_1 = arith.constant 0 : i32
    return %c0_i32, %arg0, %c0_i32_0 : i32, i32, i32
  }
  func.func @transform_5(%arg0: i32) -> (i32, i32, i32) {
    %c0_i32 = arith.constant 0 : i32
    %c0_i32_0 = arith.constant 0 : i32
    %c0_i32_1 = arith.constant 0 : i32
    return %c0_i32, %arg0, %c0_i32_0 : i32, i32, i32
  }
  func.func @transform_6(%arg0: i32) -> (i32, i32) {
    %c0_i32 = arith.constant 0 : i32
    %c0_i32_0 = arith.constant 0 : i32
    %c0_i32_1 = arith.constant 0 : i32
    return %c0_i32, %c0_i32_0 : i32, i32
  }
  func.func @transform_7(%arg0: i32) -> (i32, i32) {
    %c0_i32 = arith.constant 0 : i32
    %c0_i32_0 = arith.constant 0 : i32
    %c0_i32_1 = arith.constant 0 : i32
    return %c0_i32, %c0_i32_0 : i32, i32
  }
  func.func @transform_8(%arg0: i32) -> (i32, i32) {
    %c0_i32 = arith.constant 0 : i32
    %c0_i32_0 = arith.constant 0 : i32
    %c0_i32_1 = arith.constant 0 : i32
    return %c0_i32, %c0_i32_0 : i32, i32
  }
  func.func @transform_9(%arg0: i32) -> (i32, i32) {
    %c0_i32 = arith.constant 0 : i32
    %c0_i32_0 = arith.constant 0 : i32
    %c0_i32_1 = arith.constant 0 : i32
    return %c0_i32, %c0_i32_0 : i32, i32
  }
  func.func @transform_10(%arg0: i32) -> (i32, i32, i32) {
    %c0_i32 = arith.constant 0 : i32
    %c0_i32_0 = arith.constant 0 : i32
    %c0_i32_1 = arith.constant 0 : i32
    return %arg0, %c0_i32, %c0_i32_0 : i32, i32, i32
  }
  func.func @transform_11(%arg0: i32) -> (i32, i32, i32) {
    %c0_i32 = arith.constant 0 : i32
    %c0_i32_0 = arith.constant 0 : i32
    %c0_i32_1 = arith.constant 0 : i32
    return %c0_i32, %arg0, %c0_i32_0 : i32, i32, i32
  }
  func.func @transform_12(%arg0: i32) -> (i32, i32, i32) {
    %c0_i32 = arith.constant 0 : i32
    %c0_i32_0 = arith.constant 0 : i32
    %c0_i32_1 = arith.constant 0 : i32
    return %c0_i32, %arg0, %c0_i32_0 : i32, i32, i32
  }
}

</mosaic_0001>

<llo_original>
// kernel: net_lstm_forward.1
$region0: #{net_lstm_forward.1}
  #allocation0 [shape = 'u32[]', space=smem, size = 0x4, offset = 0x4, fixed_abs, tag = 'smem constant byte address 0x4 - core index']
  #allocation1 [shape = 'u32[144,128]{1,0:T(1,128)}', space=vmem, size = 0x12000, scoped, tag = 'internal scratch']
  %s0 = inlined_call_operand.vmem [shape: f32[1,96,8], index: 0, kind: input, shape index: {}]
  %s1 = inlined_call_operand.vmem [shape: f32[8,256], index: 1, kind: input, shape index: {}]
  %s2 = inlined_call_operand.vmem [shape: f32[64,256], index: 2, kind: input, shape index: {}]
  %s3 = inlined_call_operand.vmem [shape: f32[1,256], index: 3, kind: input, shape index: {}]
  %s4 = inlined_call_operand.vmem [shape: f32[2,8,32], index: 4, kind: input, shape index: {}]
  %s5 = inlined_call_operand.vmem [shape: f32[2,8,32], index: 5, kind: input, shape index: {}]
  %s6 = inlined_call_operand.vmem [shape: f32[32,16], index: 6, kind: input, shape index: {}]
  %s7 = inlined_call_operand.vmem [shape: f32[1,16], index: 7, kind: input, shape index: {}]
  %s8 = inlined_call_operand.vmem [shape: f32[16,4], index: 8, kind: input, shape index: {}]
  %s9 = inlined_call_operand.vmem [shape: f32[1,4], index: 9, kind: input, shape index: {}]
  %s10 = inlined_call_operand.vmem [shape: f32[1,80,4], index: 10, kind: output, shape index: {0}]
  %s11 = inlined_call_operand.vmem [shape: f32[2,8,32], index: 11, kind: output, shape index: {1}]
  %s12 = inlined_call_operand.vmem [shape: f32[2,8,32], index: 12, kind: output, shape index: {2}]
  %13 = xla_tuple %s10, %s11, %s12
  %s14 = sld [smem:[#allocation0]]
  $region66: #{net_lstm_forward.1} parent=0
    _
  %s16 = ssub.s32 1, %s14
  %s17 = scalar_select 0, %s16, %s14
  // Predicated region
  $region2: #{net_lstm_forward.1} parent=0 // pred_check
    _
  $region3: #{net_lstm_forward.1} parent=0 // pred_check_branch
    %19 = sbr.rel (0) target = $region5
  $region4: #{net_lstm_forward.1} parent=0 // pred_region
    _
  $region5: #{net_lstm_forward.1} parent=0 // pred_fallthru
    _
  // Predicated region
  $region6: #{net_lstm_forward.1} parent=0 // pred_check
    _
  $region7: #{net_lstm_forward.1} parent=0 // pred_check_branch
    %21 = sbr.rel (0) target = $region9
  $region8: #{net_lstm_forward.1} parent=0 // pred_region
    _
  $region9: #{net_lstm_forward.1} parent=0 // pred_fallthru
    _
  // Predicated region
  $region10: #{net_lstm_forward.1} parent=0 // pred_check
    _
  $region11: #{net_lstm_forward.1} parent=0 // pred_check_branch
    %23 = sbr.rel (0) target = $region13
  $region12: #{net_lstm_forward.1} parent=0 // pred_region
    _
  $region13: #{net_lstm_forward.1} parent=0 // pred_fallthru
    _
  // Predicated region
  $region14: #{net_lstm_forward.1} parent=0 // pred_check
    _
  $region15: #{net_lstm_forward.1} parent=0 // pred_check_branch
    %25 = sbr.rel (0) target = $region17
  $region16: #{net_lstm_forward.1} parent=0 // pred_region
    _
  $region17: #{net_lstm_forward.1} parent=0 // pred_fallthru
    _
  // Predicated region
  $region18: #{net_lstm_forward.1} parent=0 // pred_check
    _
  $region19: #{net_lstm_forward.1} parent=0 // pred_check_branch
    %27 = sbr.rel (0) target = $region21
  $region20: #{net_lstm_forward.1} parent=0 // pred_region
    _
  $region21: #{net_lstm_forward.1} parent=0 // pred_fallthru
    _
  // Predicated region
  $region22: #{net_lstm_forward.1} parent=0 // pred_check
    _
  $region23: #{net_lstm_forward.1} parent=0 // pred_check_branch
    %29 = sbr.rel (0) target = $region25
  $region24: #{net_lstm_forward.1} parent=0 // pred_region
    _
  $region25: #{net_lstm_forward.1} parent=0 // pred_fallthru
    _
  // Predicated region
  $region26: #{net_lstm_forward.1} parent=0 // pred_check
    _
  $region27: #{net_lstm_forward.1} parent=0 // pred_check_branch
    %31 = sbr.rel (0) target = $region29
  $region28: #{net_lstm_forward.1} parent=0 // pred_region
    _
  $region29: #{net_lstm_forward.1} parent=0 // pred_fallthru
    _
  // Predicated region
  $region30: #{net_lstm_forward.1} parent=0 // pred_check
    _
  $region31: #{net_lstm_forward.1} parent=0 // pred_check_branch
    %33 = sbr.rel (0) target = $region33
  $region32: #{net_lstm_forward.1} parent=0 // pred_region
    _
  $region33: #{net_lstm_forward.1} parent=0 // pred_fallthru
    _
  // Predicated region
  $region34: #{net_lstm_forward.1} parent=0 // pred_check
    _
  $region35: #{net_lstm_forward.1} parent=0 // pred_check_branch
    %35 = sbr.rel (0) target = $region37
  $region36: #{net_lstm_forward.1} parent=0 // pred_region
    _
  $region37: #{net_lstm_forward.1} parent=0 // pred_fallthru
    _
  // Predicated region
  $region38: #{net_lstm_forward.1} parent=0 // pred_check
    _
  $region39: #{net_lstm_forward.1} parent=0 // pred_check_branch
    %37 = sbr.rel (0) target = $region41
  $region40: #{net_lstm_forward.1} parent=0 // pred_region
    _
  $region41: #{net_lstm_forward.1} parent=0 // pred_fallthru
    _
  %v38 = vld [vmem:[%s2] sm:$0xff]
  %v39 = vld [vmem:[%s2 + $0x8] sm:$0xff]
  %v40 = vld [vmem:[%s2 + $0x10] sm:$0xff]
  %v41 = vld [vmem:[%s2 + $0x18] sm:$0xff]
  %v42 = vld [vmem:[%s2 + $0x20] sm:$0xff]
  %v43 = vld [vmem:[%s2 + $0x28] sm:$0xff]
  %v44 = vld [vmem:[%s2 + $0x30] sm:$0xff]
  %v45 = vld [vmem:[%s2 + $0x38] sm:$0xff]
  %v46 = vld [vmem:[%s2 + $0x40] sm:$0xff]
  %v47 = vld [vmem:[%s2 + $0x48] sm:$0xff]
  %v48 = vld [vmem:[%s2 + $0x50] sm:$0xff]
  %v49 = vld [vmem:[%s2 + $0x58] sm:$0xff]
  %v50 = vld [vmem:[%s2 + $0x60] sm:$0xff]
  %v51 = vld [vmem:[%s2 + $0x68] sm:$0xff]
  %v52 = vld [vmem:[%s2 + $0x70] sm:$0xff]
  %v53 = vld [vmem:[%s2 + $0x78] sm:$0xff]
  %v54 = vld [vmem:[%s6] sm:$0xff]
  %v55 = vld [vmem:[%s6 + $0x8] sm:$0xff]
  %v56 = vld [vmem:[%s6 + $0x10] sm:$0xff]
  %v57 = vld [vmem:[%s6 + $0x18] sm:$0xff]
  %v58 = vld [vmem:[%s7] sm:$0x1]
  %v59 = vld [vmem:[%s8] sm:$0xff]
  %v60 = vld [vmem:[%s8 + $0x8] sm:$0xff]
  %v61 = vld [vmem:[%s9] sm:$0x1]
  %v62 = vld [vmem:[%s0] sm:$0xff]
  %v63 = vld [vmem:[%s0 + $0x8] sm:$0xff]
  %v64 = vld [vmem:[%s0 + $0x10] sm:$0xff]
  %v65 = vld [vmem:[%s0 + $0x18] sm:$0xff]
  %v66 = vld [vmem:[%s0 + $0x20] sm:$0xff]
  %v67 = vld [vmem:[%s0 + $0x28] sm:$0xff]
  %v68 = vld [vmem:[%s0 + $0x30] sm:$0xff]
  %v69 = vld [vmem:[%s0 + $0x38] sm:$0xff]
  %v70 = vld [vmem:[%s0 + $0x40] sm:$0xff]
  %v71 = vld [vmem:[%s0 + $0x48] sm:$0xff]
  %v72 = vld [vmem:[%s0 + $0x50] sm:$0xff]
  %v73 = vld [vmem:[%s0 + $0x58] sm:$0xff]
  %v74 = vld [vmem:[%s1] sm:$0xff]
  %v75 = vld [vmem:[%s1 + $0x8] sm:$0xff]
  %v76 = vld [vmem:[%s3] sm:$0x3]
  %v78 = vlaneseq
  %v79 = vshrl.u32 %v78, 7
  %v80 = vsub.s32 0, %v79
  %v81 = vrot.slane %v76, %v80
  %v82 = vlaneseq
  %v83 = vshrl.u32 %v82, 7
  %v84 = vsub.s32 1, %v83
  %v85 = vrot.slane %v76, %v84
  %vm88 = vcmask 64512
  %v90 = vsel %vm88, %v62, 0
  %v93 = vsel %vm88, %v63, 0
  %v96 = vsel %vm88, %v64, 0
  %v99 = vsel %vm88, %v65, 0
  %v102 = vsel %vm88, %v66, 0
  %v105 = vsel %vm88, %v67, 0
  %v108 = vsel %vm88, %v68, 0
  %v111 = vsel %vm88, %v69, 0
  %v114 = vsel %vm88, %v70, 0
  %v117 = vsel %vm88, %v71, 0
  %v120 = vsel %vm88, %v72, 0
  %v123 = vsel %vm88, %v73, 0
  %125 = vmatprep.subr.mxu0 %v75
  %126 = vmatpush1.msra.mxu0 %v74
  %127 = vmatprep.subr.mxu0 0.0
  %128 = vmatpush1.msra.mxu0 0.0
  %129 = vmatprep.subr.mxu0 0.0
  %130 = vmatpush1.msra.mxu0 0.0
  %131 = vmatprep.subr.mxu0 0.0
  %132 = vmatpush1.msra.mxu0 0.0
  %133 = vmatprep.subr.mxu0 0.0
  %134 = vmatpush1.msra.mxu0 0.0
  %135 = vmatprep.subr.mxu0 0.0
  %136 = vmatpush1.msra.mxu0 0.0
  %137 = vmatprep.subr.mxu0 0.0
  %138 = vmatpush1.msra.mxu0 0.0
  %139 = vmatprep.subr.mxu0 0.0
  %140 = vmatpush1.msra.mxu0 0.0
  %141 = vmatprep.subr.mxu0 0.0
  %142 = vmatpush1.msra.mxu0 0.0
  %143 = vmatprep.subr.mxu0 0.0
  %144 = vmatpush1.msra.mxu0 0.0
  %145 = vmatprep.subr.mxu0 0.0
  %146 = vmatpush1.msra.mxu0 0.0
  %147 = vmatprep.subr.mxu0 0.0
  %148 = vmatpush1.msra.mxu0 0.0
  %149 = vmatprep.subr.mxu0 0.0
  %150 = vmatpush1.msra.mxu0 0.0
  %151 = vmatprep.subr.mxu0 0.0
  %152 = vmatpush1.msra.mxu0 0.0
  %153 = vmatprep.subr.mxu0 0.0
  %154 = vmatpush1.msra.mxu0 0.0
  %155 = vmatprep.subr.mxu0 0.0
  %156 = vmatpush1.msra.mxu0 0.0
  %157 = vmatprep.subr.mxu0 0.0
  %158 = vmatpush1.msra.mxu0 0.0
  %159 = vmatprep.subr.mxu0 0.0
  %160 = vmatpush1.msra.mxu0 0.0
  %161 = vmatprep.subr.mxu0 0.0
  %162 = vmatpush1.msra.mxu0 0.0
  %163 = vmatprep.subr.mxu0 0.0
  %164 = vmatpush1.msra.mxu0 0.0
  %165 = vmatprep.subr.mxu0 0.0
  %166 = vmatpush1.msra.mxu0 0.0
  %167 = vmatprep.subr.mxu0 0.0
  %168 = vmatpush1.msra.mxu0 0.0
  %169 = vmatprep.subr.mxu0 0.0
  %170 = vmatpush1.msra.mxu0 0.0
  %171 = vmatprep.subr.mxu0 0.0
  %172 = vmatpush1.msra.mxu0 0.0
  %173 = vmatprep.subr.mxu0 0.0
  %174 = vmatpush1.msra.mxu0 0.0
  %175 = vmatprep.subr.mxu0 0.0
  %176 = vmatpush1.msra.mxu0 0.0
  %177 = vmatprep.subr.mxu0 0.0
  %178 = vmatpush1.msra.mxu0 0.0
  %179 = vmatprep.subr.mxu0 0.0
  %180 = vmatpush1.msra.mxu0 0.0
  %181 = vmatprep.subr.mxu0 0.0
  %182 = vmatpush1.msra.mxu0 0.0
  %183 = vmatprep.subr.mxu0 0.0
  %184 = vmatpush1.msra.mxu0 0.0
  %185 = vmatprep.subr.mxu0 0.0
  %186 = vmatpush1.msra.mxu0 0.0
  %187 = vmatprep.subr.mxu0 0.0
  %188 = vmatpush1.msra.mxu0 0.0
  %189 = vmatprep.mubr.f32.mxu0 0.0
  %190 = vmatmul.mubr.f32.gmra.mrb[0].mxu0 %v90
  %v191 = vpop.f32.mrb[0].mxu0
  %v192 = vadd.f32 %v81, %v191
  %v193 = vpop.f32.mrb[0].mxu0
  %v194 = vadd.f32 %v85, %v193
  %195 = vmatprep.mubr.f32.mxu0 0.0
  %196 = vmatmul.mubr.f32.gmra.mrb[0].mxu0 %v93
  %v197 = vpop.f32.mrb[0].mxu0
  %v198 = vadd.f32 %v81, %v197
  %v199 = vpop.f32.mrb[0].mxu0
  %v200 = vadd.f32 %v85, %v199
  %201 = vmatprep.mubr.f32.mxu0 0.0
  %202 = vmatmul.mubr.f32.gmra.mrb[0].mxu0 %v96
  %v203 = vpop.f32.mrb[0].mxu0
  %v204 = vadd.f32 %v81, %v203
  %v205 = vpop.f32.mrb[0].mxu0
  %v206 = vadd.f32 %v85, %v205
  %207 = vmatprep.mubr.f32.mxu0 0.0
  %208 = vmatmul.mubr.f32.gmra.mrb[0].mxu0 %v99
  %v209 = vpop.f32.mrb[0].mxu0
  %v210 = vadd.f32 %v81, %v209
  %v211 = vpop.f32.mrb[0].mxu0
  %v212 = vadd.f32 %v85, %v211
  %213 = vmatprep.mubr.f32.mxu0 0.0
  %214 = vmatmul.mubr.f32.gmra.mrb[0].mxu0 %v102
  %v215 = vpop.f32.mrb[0].mxu0
  %v216 = vadd.f32 %v81, %v215
  %v217 = vpop.f32.mrb[0].mxu0
  %v218 = vadd.f32 %v85, %v217
  %219 = vmatprep.mubr.f32.mxu0 0.0
  %220 = vmatmul.mubr.f32.gmra.mrb[0].mxu0 %v105
  %v221 = vpop.f32.mrb[0].mxu0
  %v222 = vadd.f32 %v81, %v221
  %v223 = vpop.f32.mrb[0].mxu0
  %v224 = vadd.f32 %v85, %v223
  %225 = vmatprep.mubr.f32.mxu0 0.0
  %226 = vmatmul.mubr.f32.gmra.mrb[0].mxu0 %v108
  %v227 = vpop.f32.mrb[0].mxu0
  %v228 = vadd.f32 %v81, %v227
  %v229 = vpop.f32.mrb[0].mxu0
  %v230 = vadd.f32 %v85, %v229
  %231 = vmatprep.mubr.f32.mxu0 0.0
  %232 = vmatmul.mubr.f32.gmra.mrb[0].mxu0 %v111
  %v233 = vpop.f32.mrb[0].mxu0
  %v234 = vadd.f32 %v81, %v233
  %v235 = vpop.f32.mrb[0].mxu0
  %v236 = vadd.f32 %v85, %v235
  %237 = vmatprep.mubr.f32.mxu0 0.0
  %238 = vmatmul.mubr.f32.gmra.mrb[0].mxu0 %v114
  %v239 = vpop.f32.mrb[0].mxu0
  %v240 = vadd.f32 %v81, %v239
  %v241 = vpop.f32.mrb[0].mxu0
  %v242 = vadd.f32 %v85, %v241
  %243 = vmatprep.mubr.f32.mxu0 0.0
  %244 = vmatmul.mubr.f32.gmra.mrb[0].mxu0 %v117
  %v245 = vpop.f32.mrb[0].mxu0
  %v246 = vadd.f32 %v81, %v245
  %v247 = vpop.f32.mrb[0].mxu0
  %v248 = vadd.f32 %v85, %v247
  %249 = vmatprep.mubr.f32.mxu0 0.0
  %250 = vmatmul.mubr.f32.gmra.mrb[0].mxu0 %v120
  %v251 = vpop.f32.mrb[0].mxu0
  %v252 = vadd.f32 %v81, %v251
  %v253 = vpop.f32.mrb[0].mxu0
  %v254 = vadd.f32 %v85, %v253
  %255 = vmatprep.mubr.f32.mxu0 0.0
  %256 = vmatmul.mubr.f32.gmra.mrb[0].mxu0 %v123
  %v257 = vpop.f32.mrb[0].mxu0
  %v258 = vadd.f32 %v81, %v257
  %v259 = vpop.f32.mrb[0].mxu0
  %v260 = vadd.f32 %v85, %v259
  %261 = vdwg.mxu0
  %s262 = scalar_lea.vmem %s4, 8
  %v263 = vld [vmem:[%s262] sm:$0xff]
  %s264 = scalar_lea.vmem %s5, 8
  %v265 = vld [vmem:[%s264] sm:$0xff]
  %v266 = vld [vmem:[%s4] sm:$0xff]
  %268 = vrot.lane.b32.xlu0 %v263, 32
  %v269 = vpop.permute.xlu0 %268
  %vm271 = vcmask 261120
  %v272 = vsel %vm271, %v266, %v269
  %v273 = vld [vmem:[%s5] sm:$0xff]
  %275 = vrot.lane.b32.xlu0 %v265, 32
  %v276 = vpop.permute.xlu0 %275
  %v278 = vsel %vm271, %v273, %v276
  %vm279 = vcmask 523264
  %v281 = vsel %vm279, %v272, 0
  %283 = vmatprep.subr.mxu0 %v39
  %284 = vmatpush1.msra.mxu0 %v38
  %285 = vmatprep.subr.mxu0 %v41
  %286 = vmatpush1.msra.mxu0 %v40
  %287 = vmatprep.subr.mxu0 %v43
  %288 = vmatpush1.msra.mxu0 %v42
  %289 = vmatprep.subr.mxu0 %v45
  %290 = vmatpush1.msra.mxu0 %v44
  %291 = vmatprep.subr.mxu0 %v47
  %292 = vmatpush1.msra.mxu0 %v46
  %293 = vmatprep.subr.mxu0 %v49
  %294 = vmatpush1.msra.mxu0 %v48
  %295 = vmatprep.subr.mxu0 %v51
  %296 = vmatpush1.msra.mxu0 %v50
  %297 = vmatprep.subr.mxu0 %v53
  %298 = vmatpush1.msra.mxu0 %v52
  %299 = vmatprep.subr.mxu0 0.0
  %300 = vmatpush1.msra.mxu0 0.0
  %301 = vmatprep.subr.mxu0 0.0
  %302 = vmatpush1.msra.mxu0 0.0
  %303 = vmatprep.subr.mxu0 0.0
  %304 = vmatpush1.msra.mxu0 0.0
  %305 = vmatprep.subr.mxu0 0.0
  %306 = vmatpush1.msra.mxu0 0.0
  %307 = vmatprep.subr.mxu0 0.0
  %308 = vmatpush1.msra.mxu0 0.0
  %309 = vmatprep.subr.mxu0 0.0
  %310 = vmatpush1.msra.mxu0 0.0
  %311 = vmatprep.subr.mxu0 0.0
  %312 = vmatpush1.msra.mxu0 0.0
  %313 = vmatprep.subr.mxu0 0.0
  %314 = vmatpush1.msra.mxu0 0.0
  %315 = vmatprep.subr.mxu0 0.0
  %316 = vmatpush1.msra.mxu0 0.0
  %317 = vmatprep.subr.mxu0 0.0
  %318 = vmatpush1.msra.mxu0 0.0
  %319 = vmatprep.subr.mxu0 0.0
  %320 = vmatpush1.msra.mxu0 0.0
  %321 = vmatprep.subr.mxu0 0.0
  %322 = vmatpush1.msra.mxu0 0.0
  %323 = vmatprep.subr.mxu0 0.0
  %324 = vmatpush1.msra.mxu0 0.0
  %325 = vmatprep.subr.mxu0 0.0
  %326 = vmatpush1.msra.mxu0 0.0
  %327 = vmatprep.subr.mxu0 0.0
  %328 = vmatpush1.msra.mxu0 0.0
  %329 = vmatprep.subr.mxu0 0.0
  %330 = vmatpush1.msra.mxu0 0.0
  %331 = vmatprep.subr.mxu0 0.0
  %332 = vmatpush1.msra.mxu0 0.0
  %333 = vmatprep.subr.mxu0 0.0
  %334 = vmatpush1.msra.mxu0 0.0
  %335 = vmatprep.subr.mxu0 0.0
  %336 = vmatpush1.msra.mxu0 0.0
  %337 = vmatprep.subr.mxu0 0.0
  %338 = vmatpush1.msra.mxu0 0.0
  %339 = vmatprep.subr.mxu0 0.0
  %340 = vmatpush1.msra.mxu0 0.0
  %341 = vmatprep.subr.mxu0 0.0
  %342 = vmatpush1.msra.mxu0 0.0
  %343 = vmatprep.subr.mxu0 0.0
  %344 = vmatpush1.msra.mxu0 0.0
  %345 = vmatprep.subr.mxu0 0.0
  %346 = vmatpush1.msra.mxu0 0.0
  %347 = vmatprep.mubr.f32.mxu0 0.0
  %348 = vmatmul.mubr.f32.gmra.mrb[0].mxu0 %v281
  %v349 = vpop.f32.mrb[0].mxu0
  %v350 = vadd.f32 %v192, %v349
  %v351 = vpop.f32.mrb[0].mxu0
  %v352 = vadd.f32 %v194, %v351
  %353 = vdwg.mxu0
  %v354 = vxor.u32 %v350, 2147483648
  %v355 = vxor.u32 %v352, 2147483648
  %v356 = vmul.f32 %v354, 1.442695
  %v357 = vpow.pop %v356
  %v358 = vmul.f32 %v355, 1.442695
  %v359 = vpow.pop %v358
  %v360 = vadd.f32 %v357, 1.0
  %v361 = vadd.f32 %v359, 1.0
  %v362 = vrcp.pop %v360
  %v363 = vmul.f32 1.0, %v362
  %v364 = vrcp.pop %v361
  %v365 = vmul.f32 1.0, %v364
  %v366 = vtanh.pop %v352
  %368 = vrot.lane.b32.xlu0 %v278, 64
  %v369 = vpop.permute.xlu0 %368
  %v371 = vmul.f32 %v363, %v369
  %373 = vrot.lane.b32.xlu0 %v366, 64
  %v374 = vpop.permute.xlu0 %373
  %v376 = vmul.f32 %v363, %v374
  %378 = vrot.lane.b32.xlu0 %v376, 64
  %v379 = vpop.permute.xlu0 %378
  %v381 = vadd.f32 %v371, %v379
  %v382 = vtanh.pop %v381
  %384 = vrot.lane.b32.xlu0 %v382, 64
  %v385 = vpop.permute.xlu0 %384
  %v387 = vmul.f32 %v365, %v385
  %v388 = vsel %vm271, %v387, %v269
  %390 = vrot.lane.b32.xlu0 %v381, 64
  %v391 = vpop.permute.xlu0 %390
  %v393 = vsel %vm271, %v391, %v276
  %v395 = vsel %vm279, %v388, 0
  %397 = vmatprep.subr.mxu0 %v39
  %398 = vmatpush1.msra.mxu0 %v38
  %399 = vmatprep.subr.mxu0 %v41
  %400 = vmatpush1.msra.mxu0 %v40
  %401 = vmatprep.subr.mxu0 %v43
  %402 = vmatpush1.msra.mxu0 %v42
  %403 = vmatprep.subr.mxu0 %v45
  %404 = vmatpush1.msra.mxu0 %v44
  %405 = vmatprep.subr.mxu0 %v47
  %406 = vmatpush1.msra.mxu0 %v46
  %407 = vmatprep.subr.mxu0 %v49
  %408 = vmatpush1.msra.mxu0 %v48
  %409 = vmatprep.subr.mxu0 %v51
  %410 = vmatpush1.msra.mxu0 %v50
  %411 = vmatprep.subr.mxu0 %v53
  %412 = vmatpush1.msra.mxu0 %v52
  %413 = vmatprep.subr.mxu0 0.0
  %414 = vmatpush1.msra.mxu0 0.0
  %415 = vmatprep.subr.mxu0 0.0
  %416 = vmatpush1.msra.mxu0 0.0
  %417 = vmatprep.subr.mxu0 0.0
  %418 = vmatpush1.msra.mxu0 0.0
  %419 = vmatprep.subr.mxu0 0.0
  %420 = vmatpush1.msra.mxu0 0.0
  %421 = vmatprep.subr.mxu0 0.0
  %422 = vmatpush1.msra.mxu0 0.0
  %423 = vmatprep.subr.mxu0 0.0
  %424 = vmatpush1.msra.mxu0 0.0
  %425 = vmatprep.subr.mxu0 0.0
  %426 = vmatpush1.msra.mxu0 0.0
  %427 = vmatprep.subr.mxu0 0.0
  %428 = vmatpush1.msra.mxu0 0.0
  %429 = vmatprep.subr.mxu0 0.0
  %430 = vmatpush1.msra.mxu0 0.0
  %431 = vmatprep.subr.mxu0 0.0
  %432 = vmatpush1.msra.mxu0 0.0
  %433 = vmatprep.subr.mxu0 0.0
  %434 = vmatpush1.msra.mxu0 0.0
  %435 = vmatprep.subr.mxu0 0.0
  %436 = vmatpush1.msra.mxu0 0.0
  %437 = vmatprep.subr.mxu0 0.0
  %438 = vmatpush1.msra.mxu0 0.0
  %439 = vmatprep.subr.mxu0 0.0
  %440 = vmatpush1.msra.mxu0 0.0
  %441 = vmatprep.subr.mxu0 0.0
  %442 = vmatpush1.msra.mxu0 0.0
  %443 = vmatprep.subr.mxu0 0.0
  %444 = vmatpush1.msra.mxu0 0.0
  %445 = vmatprep.subr.mxu0 0.0
  %446 = vmatpush1.msra.mxu0 0.0
  %447 = vmatprep.subr.mxu0 0.0
  %448 = vmatpush1.msra.mxu0 0.0
  %449 = vmatprep.subr.mxu0 0.0
  %450 = vmatpush1.msra.mxu0 0.0
  %451 = vmatprep.subr.mxu0 0.0
  %452 = vmatpush1.msra.mxu0 0.0
  %453 = vmatprep.subr.mxu0 0.0
  %454 = vmatpush1.msra.mxu0 0.0
  %455 = vmatprep.subr.mxu0 0.0
  %456 = vmatpush1.msra.mxu0 0.0
  %457 = vmatprep.subr.mxu0 0.0
  %458 = vmatpush1.msra.mxu0 0.0
  %459 = vmatprep.subr.mxu0 0.0
  %460 = vmatpush1.msra.mxu0 0.0
  %461 = vmatprep.mubr.f32.mxu0 0.0
  %462 = vmatmul.mubr.f32.gmra.mrb[0].mxu0 %v395
  %v463 = vpop.f32.mrb[0].mxu0
  %v464 = vadd.f32 %v198, %v463
  %v465 = vpop.f32.mrb[0].mxu0
  %v466 = vadd.f32 %v200, %v465
  %467 = vdwg.mxu0
  %v468 = vxor.u32 %v464, 2147483648
  %v469 = vxor.u32 %v466, 2147483648
  %v470 = vmul.f32 %v468, 1.442695
  %v471 = vpow.pop %v470
  %v472 = vmul.f32 %v469, 1.442695
  %v473 = vpow.pop %v472
  %v474 = vadd.f32 %v471, 1.0
  %v475 = vadd.f32 %v473, 1.0
  %v476 = vrcp.pop %v474
  %v477 = vmul.f32 1.0, %v476
  %v478 = vrcp.pop %v475
  %v479 = vmul.f32 1.0, %v478
  %v480 = vtanh.pop %v466
  %482 = vrot.lane.b32.xlu0 %v393, 64
  %v483 = vpop.permute.xlu0 %482
  %v485 = vmul.f32 %v477, %v483
  %487 = vrot.lane.b32.xlu0 %v480, 64
  %v488 = vpop.permute.xlu0 %487
  %v490 = vmul.f32 %v477, %v488
  %492 = vrot.lane.b32.xlu0 %v490, 64
  %v493 = vpop.permute.xlu0 %492
  %v495 = vadd.f32 %v485, %v493
  %v496 = vtanh.pop %v495
  %498 = vrot.lane.b32.xlu0 %v496, 64
  %v499 = vpop.permute.xlu0 %498
  %v501 = vmul.f32 %v479, %v499
  %v503 = vsel %vm279, %v501, 0
  %505 = vmatprep.subr.mxu0 %v39
  %506 = vmatpush1.msra.mxu0 %v38
  %507 = vmatprep.subr.mxu0 %v41
  %508 = vmatpush1.msra.mxu0 %v40
  %509 = vmatprep.subr.mxu0 %v43
  %510 = vmatpush1.msra.mxu0 %v42
  %511 = vmatprep.subr.mxu0 %v45
  %512 = vmatpush1.msra.mxu0 %v44
  %513 = vmatprep.subr.mxu0 %v47
  %514 = vmatpush1.msra.mxu0 %v46
  %515 = vmatprep.subr.mxu0 %v49
  %516 = vmatpush1.msra.mxu0 %v48
  %517 = vmatprep.subr.mxu0 %v51
  %518 = vmatpush1.msra.mxu0 %v50
  %519 = vmatprep.subr.mxu0 %v53
  %520 = vmatpush1.msra.mxu0 %v52
  %521 = vmatprep.subr.mxu0 0.0
  %522 = vmatpush1.msra.mxu0 0.0
  %523 = vmatprep.subr.mxu0 0.0
  %524 = vmatpush1.msra.mxu0 0.0
  %525 = vmatprep.subr.mxu0 0.0
  %526 = vmatpush1.msra.mxu0 0.0
  %527 = vmatprep.subr.mxu0 0.0
  %528 = vmatpush1.msra.mxu0 0.0
  %529 = vmatprep.subr.mxu0 0.0
  %530 = vmatpush1.msra.mxu0 0.0
  %531 = vmatprep.subr.mxu0 0.0
  %532 = vmatpush1.msra.mxu0 0.0
  %533 = vmatprep.subr.mxu0 0.0
  %534 = vmatpush1.msra.mxu0 0.0
  %535 = vmatprep.subr.mxu0 0.0
  %536 = vmatpush1.msra.mxu0 0.0
  %537 = vmatprep.subr.mxu0 0.0
  %538 = vmatpush1.msra.mxu0 0.0
  %539 = vmatprep.subr.mxu0 0.0
  %540 = vmatpush1.msra.mxu0 0.0
  %541 = vmatprep.subr.mxu0 0.0
  %542 = vmatpush1.msra.mxu0 0.0
  %543 = vmatprep.subr.mxu0 0.0
  %544 = vmatpush1.msra.mxu0 0.0
  %545 = vmatprep.subr.mxu0 0.0
  %546 = vmatpush1.msra.mxu0 0.0
  %547 = vmatprep.subr.mxu0 0.0
  %548 = vmatpush1.msra.mxu0 0.0
  %549 = vmatprep.subr.mxu0 0.0
  %550 = vmatpush1.msra.mxu0 0.0
  %551 = vmatprep.subr.mxu0 0.0
  %552 = vmatpush1.msra.mxu0 0.0
  %553 = vmatprep.subr.mxu0 0.0
  %554 = vmatpush1.msra.mxu0 0.0
  %555 = vmatprep.subr.mxu0 0.0
  %556 = vmatpush1.msra.mxu0 0.0
  %557 = vmatprep.subr.mxu0 0.0
  %558 = vmatpush1.msra.mxu0 0.0
  %559 = vmatprep.subr.mxu0 0.0
  %560 = vmatpush1.msra.mxu0 0.0
  %561 = vmatprep.subr.mxu0 0.0
  %562 = vmatpush1.msra.mxu0 0.0
  %563 = vmatprep.subr.mxu0 0.0
  %564 = vmatpush1.msra.mxu0 0.0
  %565 = vmatprep.subr.mxu0 0.0
  %566 = vmatpush1.msra.mxu0 0.0
  %567 = vmatprep.subr.mxu0 0.0
  %568 = vmatpush1.msra.mxu0 0.0
  %569 = vmatprep.mubr.f32.mxu0 0.0
  %570 = vmatmul.mubr.f32.gmra.mrb[0].mxu0 %v503
  %v571 = vpop.f32.mrb[0].mxu0
  %v572 = vadd.f32 %v204, %v571
  %v573 = vpop.f32.mrb[0].mxu0
  %v574 = vadd.f32 %v206, %v573
  %575 = vdwg.mxu0
  %v576 = vxor.u32 %v572, 2147483648
  %v577 = vxor.u32 %v574, 2147483648
  %v578 = vmul.f32 %v576, 1.442695
  %v579 = vpow.pop %v578
  %v580 = vmul.f32 %v577, 1.442695
  %v581 = vpow.pop %v580
  %v582 = vadd.f32 %v579, 1.0
  %v583 = vadd.f32 %v581, 1.0
  %v584 = vrcp.pop %v582
  %v585 = vmul.f32 1.0, %v584
  %v586 = vrcp.pop %v583
  %v587 = vmul.f32 1.0, %v586
  %v588 = vtanh.pop %v574
  %v589 = vmul.f32 %v585, %v495
  %591 = vrot.lane.b32.xlu0 %v588, 64
  %v592 = vpop.permute.xlu0 %591
  %v594 = vmul.f32 %v585, %v592
  %596 = vrot.lane.b32.xlu0 %v594, 64
  %v597 = vpop.permute.xlu0 %596
  %v599 = vadd.f32 %v589, %v597
  %v600 = vtanh.pop %v599
  %602 = vrot.lane.b32.xlu0 %v600, 64
  %v603 = vpop.permute.xlu0 %602
  %v605 = vmul.f32 %v587, %v603
  %v607 = vsel %vm279, %v605, 0
  %609 = vmatprep.subr.mxu0 %v39
  %610 = vmatpush1.msra.mxu0 %v38
  %611 = vmatprep.subr.mxu0 %v41
  %612 = vmatpush1.msra.mxu0 %v40
  %613 = vmatprep.subr.mxu0 %v43
  %614 = vmatpush1.msra.mxu0 %v42
  %615 = vmatprep.subr.mxu0 %v45
  %616 = vmatpush1.msra.mxu0 %v44
  %617 = vmatprep.subr.mxu0 %v47
  %618 = vmatpush1.msra.mxu0 %v46
  %619 = vmatprep.subr.mxu0 %v49
  %620 = vmatpush1.msra.mxu0 %v48
  %621 = vmatprep.subr.mxu0 %v51
  %622 = vmatpush1.msra.mxu0 %v50
  %623 = vmatprep.subr.mxu0 %v53
  %624 = vmatpush1.msra.mxu0 %v52
  %625 = vmatprep.subr.mxu0 0.0
  %626 = vmatpush1.msra.mxu0 0.0
  %627 = vmatprep.subr.mxu0 0.0
  %628 = vmatpush1.msra.mxu0 0.0
  %629 = vmatprep.subr.mxu0 0.0
  %630 = vmatpush1.msra.mxu0 0.0
  %631 = vmatprep.subr.mxu0 0.0
  %632 = vmatpush1.msra.mxu0 0.0
  %633 = vmatprep.subr.mxu0 0.0
  %634 = vmatpush1.msra.mxu0 0.0
  %635 = vmatprep.subr.mxu0 0.0
  %636 = vmatpush1.msra.mxu0 0.0
  %637 = vmatprep.subr.mxu0 0.0
  %638 = vmatpush1.msra.mxu0 0.0
  %639 = vmatprep.subr.mxu0 0.0
  %640 = vmatpush1.msra.mxu0 0.0
  %641 = vmatprep.subr.mxu0 0.0
  %642 = vmatpush1.msra.mxu0 0.0
  %643 = vmatprep.subr.mxu0 0.0
  %644 = vmatpush1.msra.mxu0 0.0
  %645 = vmatprep.subr.mxu0 0.0
  %646 = vmatpush1.msra.mxu0 0.0
  %647 = vmatprep.subr.mxu0 0.0
  %648 = vmatpush1.msra.mxu0 0.0
  %649 = vmatprep.subr.mxu0 0.0
  %650 = vmatpush1.msra.mxu0 0.0
  %651 = vmatprep.subr.mxu0 0.0
  %652 = vmatpush1.msra.mxu0 0.0
  %653 = vmatprep.subr.mxu0 0.0
  %654 = vmatpush1.msra.mxu0 0.0
  %655 = vmatprep.subr.mxu0 0.0
  %656 = vmatpush1.msra.mxu0 0.0
  %657 = vmatprep.subr.mxu0 0.0
  %658 = vmatpush1.msra.mxu0 0.0
  %659 = vmatprep.subr.mxu0 0.0
  %660 = vmatpush1.msra.mxu0 0.0
  %661 = vmatprep.subr.mxu0 0.0
  %662 = vmatpush1.msra.mxu0 0.0
  %663 = vmatprep.subr.mxu0 0.0
  %664 = vmatpush1.msra.mxu0 0.0
  %665 = vmatprep.subr.mxu0 0.0
  %666 = vmatpush1.msra.mxu0 0.0
  %667 = vmatprep.subr.mxu0 0.0
  %668 = vmatpush1.msra.mxu0 0.0
  %669 = vmatprep.subr.mxu0 0.0
  %670 = vmatpush1.msra.mxu0 0.0
  %671 = vmatprep.subr.mxu0 0.0
  %672 = vmatpush1.msra.mxu0 0.0
  %673 = vmatprep.mubr.f32.mxu0 0.0
  %674 = vmatmul.mubr.f32.gmra.mrb[0].mxu0 %v607
  %v675 = vpop.f32.mrb[0].mxu0
  %v676 = vadd.f32 %v210, %v675
  %v677 = vpop.f32.mrb[0].mxu0
  %v678 = vadd.f32 %v212, %v677
  %679 = vdwg.mxu0
  %v680 = vxor.u32 %v676, 2147483648
  %v681 = vxor.u32 %v678, 2147483648
  %v682 = vmul.f32 %v680, 1.442695
  %v683 = vpow.pop %v682
  %v684 = vmul.f32 %v681, 1.442695
  %v685 = vpow.pop %v684
  %v686 = vadd.f32 %v683, 1.0
  %v687 = vadd.f32 %v685, 1.0
  %v688 = vrcp.pop %v686
  %v689 = vmul.f32 1.0, %v688
  %v690 = vrcp.pop %v687
  %v691 = vmul.f32 1.0, %v690
  %v692 = vtanh.pop %v678
  %v693 = vmul.f32 %v689, %v599
  %695 = vrot.lane.b32.xlu0 %v692, 64
  %v696 = vpop.permute.xlu0 %695
  %v698 = vmul.f32 %v689, %v696
  %700 = vrot.lane.b32.xlu0 %v698, 64
  %v701 = vpop.permute.xlu0 %700
  %v703 = vadd.f32 %v693, %v701
  %v704 = vtanh.pop %v703
  %706 = vrot.lane.b32.xlu0 %v704, 64
  %v707 = vpop.permute.xlu0 %706
  %v709 = vmul.f32 %v691, %v707
  %v711 = vsel %vm279, %v709, 0
  %713 = vmatprep.subr.mxu0 %v39
  %714 = vmatpush1.msra.mxu0 %v38
  %715 = vmatprep.subr.mxu0 %v41
  %716 = vmatpush1.msra.mxu0 %v40
  %717 = vmatprep.subr.mxu0 %v43
  %718 = vmatpush1.msra.mxu0 %v42
  %719 = vmatprep.subr.mxu0 %v45
  %720 = vmatpush1.msra.mxu0 %v44
  %721 = vmatprep.subr.mxu0 %v47
  %722 = vmatpush1.msra.mxu0 %v46
  %723 = vmatprep.subr.mxu0 %v49
  %724 = vmatpush1.msra.mxu0 %v48
  %725 = vmatprep.subr.mxu0 %v51
  %726 = vmatpush1.msra.mxu0 %v50
  %727 = vmatprep.subr.mxu0 %v53
  %728 = vmatpush1.msra.mxu0 %v52
  %729 = vmatprep.subr.mxu0 0.0
  %730 = vmatpush1.msra.mxu0 0.0
  %731 = vmatprep.subr.mxu0 0.0
  %732 = vmatpush1.msra.mxu0 0.0
  %733 = vmatprep.subr.mxu0 0.0
  %734 = vmatpush1.msra.mxu0 0.0
  %735 = vmatprep.subr.mxu0 0.0
  %736 = vmatpush1.msra.mxu0 0.0
  %737 = vmatprep.subr.mxu0 0.0
  %738 = vmatpush1.msra.mxu0 0.0
  %739 = vmatprep.subr.mxu0 0.0
  %740 = vmatpush1.msra.mxu0 0.0
  %741 = vmatprep.subr.mxu0 0.0
  %742 = vmatpush1.msra.mxu0 0.0
  %743 = vmatprep.subr.mxu0 0.0
  %744 = vmatpush1.msra.mxu0 0.0
  %745 = vmatprep.subr.mxu0 0.0
  %746 = vmatpush1.msra.mxu0 0.0
  %747 = vmatprep.subr.mxu0 0.0
  %748 = vmatpush1.msra.mxu0 0.0
  %749 = vmatprep.subr.mxu0 0.0
  %750 = vmatpush1.msra.mxu0 0.0
  %751 = vmatprep.subr.mxu0 0.0
  %752 = vmatpush1.msra.mxu0 0.0
  %753 = vmatprep.subr.mxu0 0.0
  %754 = vmatpush1.msra.mxu0 0.0
  %755 = vmatprep.subr.mxu0 0.0
  %756 = vmatpush1.msra.mxu0 0.0
  %757 = vmatprep.subr.mxu0 0.0
  %758 = vmatpush1.msra.mxu0 0.0
  %759 = vmatprep.subr.mxu0 0.0
  %760 = vmatpush1.msra.mxu0 0.0
  %761 = vmatprep.subr.mxu0 0.0
  %762 = vmatpush1.msra.mxu0 0.0
  %763 = vmatprep.subr.mxu0 0.0
  %764 = vmatpush1.msra.mxu0 0.0
  %765 = vmatprep.subr.mxu0 0.0
  %766 = vmatpush1.msra.mxu0 0.0
  %767 = vmatprep.subr.mxu0 0.0
  %768 = vmatpush1.msra.mxu0 0.0
  %769 = vmatprep.subr.mxu0 0.0
  %770 = vmatpush1.msra.mxu0 0.0
  %771 = vmatprep.subr.mxu0 0.0
  %772 = vmatpush1.msra.mxu0 0.0
  %773 = vmatprep.subr.mxu0 0.0
  %774 = vmatpush1.msra.mxu0 0.0
  %775 = vmatprep.subr.mxu0 0.0
  %776 = vmatpush1.msra.mxu0 0.0
  %777 = vmatprep.mubr.f32.mxu0 0.0
  %778 = vmatmul.mubr.f32.gmra.mrb[0].mxu0 %v711
  %v779 = vpop.f32.mrb[0].mxu0
  %v780 = vadd.f32 %v216, %v779
  %v781 = vpop.f32.mrb[0].mxu0
  %v782 = vadd.f32 %v218, %v781
  %783 = vdwg.mxu0
  %v784 = vxor.u32 %v780, 2147483648
  %v785 = vxor.u32 %v782, 2147483648
  %v786 = vmul.f32 %v784, 1.442695
  %v787 = vpow.pop %v786
  %v788 = vmul.f32 %v785, 1.442695
  %v789 = vpow.pop %v788
  %v790 = vadd.f32 %v787, 1.0
  %v791 = vadd.f32 %v789, 1.0
  %v792 = vrcp.pop %v790
  %v793 = vmul.f32 1.0, %v792
  %v794 = vrcp.pop %v791
  %v795 = vmul.f32 1.0, %v794
  %v796 = vtanh.pop %v782
  %v797 = vmul.f32 %v793, %v703
  %799 = vrot.lane.b32.xlu0 %v796, 64
  %v800 = vpop.permute.xlu0 %799
  %v802 = vmul.f32 %v793, %v800
  %804 = vrot.lane.b32.xlu0 %v802, 64
  %v805 = vpop.permute.xlu0 %804
  %v807 = vadd.f32 %v797, %v805
  %v808 = vtanh.pop %v807
  %810 = vrot.lane.b32.xlu0 %v808, 64
  %v811 = vpop.permute.xlu0 %810
  %v813 = vmul.f32 %v795, %v811
  %v815 = vsel %vm279, %v813, 0
  %817 = vmatprep.subr.mxu0 %v39
  %818 = vmatpush1.msra.mxu0 %v38
  %819 = vmatprep.subr.mxu0 %v41
  %820 = vmatpush1.msra.mxu0 %v40
  %821 = vmatprep.subr.mxu0 %v43
  %822 = vmatpush1.msra.mxu0 %v42
  %823 = vmatprep.subr.mxu0 %v45
  %824 = vmatpush1.msra.mxu0 %v44
  %825 = vmatprep.subr.mxu0 %v47
  %826 = vmatpush1.msra.mxu0 %v46
  %827 = vmatprep.subr.mxu0 %v49
  %828 = vmatpush1.msra.mxu0 %v48
  %829 = vmatprep.subr.mxu0 %v51
  %830 = vmatpush1.msra.mxu0 %v50
  %831 = vmatprep.subr.mxu0 %v53
  %832 = vmatpush1.msra.mxu0 %v52
  %833 = vmatprep.subr.mxu0 0.0
  %834 = vmatpush1.msra.mxu0 0.0
  %835 = vmatprep.subr.mxu0 0.0
  %836 = vmatpush1.msra.mxu0 0.0
  %837 = vmatprep.subr.mxu0 0.0
  %838 = vmatpush1.msra.mxu0 0.0
  %839 = vmatprep.subr.mxu0 0.0
  %840 = vmatpush1.msra.mxu0 0.0
  %841 = vmatprep.subr.mxu0 0.0
  %842 = vmatpush1.msra.mxu0 0.0
  %843 = vmatprep.subr.mxu0 0.0
  %844 = vmatpush1.msra.mxu0 0.0
  %845 = vmatprep.subr.mxu0 0.0
  %846 = vmatpush1.msra.mxu0 0.0
  %847 = vmatprep.subr.mxu0 0.0
  %848 = vmatpush1.msra.mxu0 0.0
  %849 = vmatprep.subr.mxu0 0.0
  %850 = vmatpush1.msra.mxu0 0.0
  %851 = vmatprep.subr.mxu0 0.0
  %852 = vmatpush1.msra.mxu0 0.0
  %853 = vmatprep.subr.mxu0 0.0
  %854 = vmatpush1.msra.mxu0 0.0
  %855 = vmatprep.subr.mxu0 0.0
  %856 = vmatpush1.msra.mxu0 0.0
  %857 = vmatprep.subr.mxu0 0.0
  %858 = vmatpush1.msra.mxu0 0.0
  %859 = vmatprep.subr.mxu0 0.0
  %860 = vmatpush1.msra.mxu0 0.0
  %861 = vmatprep.subr.mxu0 0.0
  %862 = vmatpush1.msra.mxu0 0.0
  %863 = vmatprep.subr.mxu0 0.0
  %864 = vmatpush1.msra.mxu0 0.0
  %865 = vmatprep.subr.mxu0 0.0
  %866 = vmatpush1.msra.mxu0 0.0
  %867 = vmatprep.subr.mxu0 0.0
  %868 = vmatpush1.msra.mxu0 0.0
  %869 = vmatprep.subr.mxu0 0.0
  %870 = vmatpush1.msra.mxu0 0.0
  %871 = vmatprep.subr.mxu0 0.0
  %872 = vmatpush1.msra.mxu0 0.0
  %873 = vmatprep.subr.mxu0 0.0
  %874 = vmatpush1.msra.mxu0 0.0
  %875 = vmatprep.subr.mxu0 0.0
  %876 = vmatpush1.msra.mxu0 0.0
  %877 = vmatprep.subr.mxu0 0.0
  %878 = vmatpush1.msra.mxu0 0.0
  %879 = vmatprep.subr.mxu0 0.0
  %880 = vmatpush1.msra.mxu0 0.0
  %881 = vmatprep.mubr.f32.mxu0 0.0
  %882 = vmatmul.mubr.f32.gmra.mrb[0].mxu0 %v815
  %v883 = vpop.f32.mrb[0].mxu0
  %v884 = vadd.f32 %v222, %v883
  %v885 = vpop.f32.mrb[0].mxu0
  %v886 = vadd.f32 %v224, %v885
  %887 = vdwg.mxu0
  %v888 = vxor.u32 %v884, 2147483648
  %v889 = vxor.u32 %v886, 2147483648
  %v890 = vmul.f32 %v888, 1.442695
  %v891 = vpow.pop %v890
  %v892 = vmul.f32 %v889, 1.442695
  %v893 = vpow.pop %v892
  %v894 = vadd.f32 %v891, 1.0
  %v895 = vadd.f32 %v893, 1.0
  %v896 = vrcp.pop %v894
  %v897 = vmul.f32 1.0, %v896
  %v898 = vrcp.pop %v895
  %v899 = vmul.f32 1.0, %v898
  %v900 = vtanh.pop %v886
  %v901 = vmul.f32 %v897, %v807
  %903 = vrot.lane.b32.xlu0 %v900, 64
  %v904 = vpop.permute.xlu0 %903
  %v906 = vmul.f32 %v897, %v904
  %908 = vrot.lane.b32.xlu0 %v906, 64
  %v909 = vpop.permute.xlu0 %908
  %v911 = vadd.f32 %v901, %v909
  %v912 = vtanh.pop %v911
  %914 = vrot.lane.b32.xlu0 %v912, 64
  %v915 = vpop.permute.xlu0 %914
  %v917 = vmul.f32 %v899, %v915
  %v919 = vsel %vm279, %v917, 0
  %921 = vmatprep.subr.mxu0 %v39
  %922 = vmatpush1.msra.mxu0 %v38
  %923 = vmatprep.subr.mxu0 %v41
  %924 = vmatpush1.msra.mxu0 %v40
  %925 = vmatprep.subr.mxu0 %v43
  %926 = vmatpush1.msra.mxu0 %v42
  %927 = vmatprep.subr.mxu0 %v45
  %928 = vmatpush1.msra.mxu0 %v44
  %929 = vmatprep.subr.mxu0 %v47
  %930 = vmatpush1.msra.mxu0 %v46
  %931 = vmatprep.subr.mxu0 %v49
  %932 = vmatpush1.msra.mxu0 %v48
  %933 = vmatprep.subr.mxu0 %v51
  %934 = vmatpush1.msra.mxu0 %v50
  %935 = vmatprep.subr.mxu0 %v53
  %936 = vmatpush1.msra.mxu0 %v52
  %937 = vmatprep.subr.mxu0 0.0
  %938 = vmatpush1.msra.mxu0 0.0
  %939 = vmatprep.subr.mxu0 0.0
  %940 = vmatpush1.msra.mxu0 0.0
  %941 = vmatprep.subr.mxu0 0.0
  %942 = vmatpush1.msra.mxu0 0.0
  %943 = vmatprep.subr.mxu0 0.0
  %944 = vmatpush1.msra.mxu0 0.0
  %945 = vmatprep.subr.mxu0 0.0
  %946 = vmatpush1.msra.mxu0 0.0
  %947 = vmatprep.subr.mxu0 0.0
  %948 = vmatpush1.msra.mxu0 0.0
  %949 = vmatprep.subr.mxu0 0.0
  %950 = vmatpush1.msra.mxu0 0.0
  %951 = vmatprep.subr.mxu0 0.0
  %952 = vmatpush1.msra.mxu0 0.0
  %953 = vmatprep.subr.mxu0 0.0
  %954 = vmatpush1.msra.mxu0 0.0
  %955 = vmatprep.subr.mxu0 0.0
  %956 = vmatpush1.msra.mxu0 0.0
  %957 = vmatprep.subr.mxu0 0.0
  %958 = vmatpush1.msra.mxu0 0.0
  %959 = vmatprep.subr.mxu0 0.0
  %960 = vmatpush1.msra.mxu0 0.0
  %961 = vmatprep.subr.mxu0 0.0
  %962 = vmatpush1.msra.mxu0 0.0
  %963 = vmatprep.subr.mxu0 0.0
  %964 = vmatpush1.msra.mxu0 0.0
  %965 = vmatprep.subr.mxu0 0.0
  %966 = vmatpush1.msra.mxu0 0.0
  %967 = vmatprep.subr.mxu0 0.0
  %968 = vmatpush1.msra.mxu0 0.0
  %969 = vmatprep.subr.mxu0 0.0
  %970 = vmatpush1.msra.mxu0 0.0
  %971 = vmatprep.subr.mxu0 0.0
  %972 = vmatpush1.msra.mxu0 0.0
  %973 = vmatprep.subr.mxu0 0.0
  %974 = vmatpush1.msra.mxu0 0.0
  %975 = vmatprep.subr.mxu0 0.0
  %976 = vmatpush1.msra.mxu0 0.0
  %977 = vmatprep.subr.mxu0 0.0
  %978 = vmatpush1.msra.mxu0 0.0
  %979 = vmatprep.subr.mxu0 0.0
  %980 = vmatpush1.msra.mxu0 0.0
  %981 = vmatprep.subr.mxu0 0.0
  %982 = vmatpush1.msra.mxu0 0.0
  %983 = vmatprep.subr.mxu0 0.0
  %984 = vmatpush1.msra.mxu0 0.0
  %985 = vmatprep.mubr.f32.mxu0 0.0
  %986 = vmatmul.mubr.f32.gmra.mrb[0].mxu0 %v919
  %v987 = vpop.f32.mrb[0].mxu0
  %v988 = vadd.f32 %v228, %v987
  %v989 = vpop.f32.mrb[0].mxu0
  %v990 = vadd.f32 %v230, %v989
  %991 = vdwg.mxu0
  %v992 = vxor.u32 %v988, 2147483648
  %v993 = vxor.u32 %v990, 2147483648
  %v994 = vmul.f32 %v992, 1.442695
  %v995 = vpow.pop %v994
  %v996 = vmul.f32 %v993, 1.442695
  %v997 = vpow.pop %v996
  %v998 = vadd.f32 %v995, 1.0
  %v999 = vadd.f32 %v997, 1.0
  %v1000 = vrcp.pop %v998
  %v1001 = vmul.f32 1.0, %v1000
  %v1002 = vrcp.pop %v999
  %v1003 = vmul.f32 1.0, %v1002
  %v1004 = vtanh.pop %v990
  %v1005 = vmul.f32 %v1001, %v911
  %1007 = vrot.lane.b32.xlu0 %v1004, 64
  %v1008 = vpop.permute.xlu0 %1007
  %v1010 = vmul.f32 %v1001, %v1008
  %1012 = vrot.lane.b32.xlu0 %v1010, 64
  %v1013 = vpop.permute.xlu0 %1012
  %v1015 = vadd.f32 %v1005, %v1013
  %v1016 = vtanh.pop %v1015
  %1018 = vrot.lane.b32.xlu0 %v1016, 64
  %v1019 = vpop.permute.xlu0 %1018
  %v1021 = vmul.f32 %v1003, %v1019
  %v1023 = vsel %vm279, %v1021, 0
  %1025 = vmatprep.subr.mxu0 %v39
  %1026 = vmatpush1.msra.mxu0 %v38
  %1027 = vmatprep.subr.mxu0 %v41
  %1028 = vmatpush1.msra.mxu0 %v40
  %1029 = vmatprep.subr.mxu0 %v43
  %1030 = vmatpush1.msra.mxu0 %v42
  %1031 = vmatprep.subr.mxu0 %v45
  %1032 = vmatpush1.msra.mxu0 %v44
  %1033 = vmatprep.subr.mxu0 %v47
  %1034 = vmatpush1.msra.mxu0 %v46
  %1035 = vmatprep.subr.mxu0 %v49
  %1036 = vmatpush1.msra.mxu0 %v48
  %1037 = vmatprep.subr.mxu0 %v51
  %1038 = vmatpush1.msra.mxu0 %v50
  %1039 = vmatprep.subr.mxu0 %v53
  %1040 = vmatpush1.msra.mxu0 %v52
  %1041 = vmatprep.subr.mxu0 0.0
  %1042 = vmatpush1.msra.mxu0 0.0
  %1043 = vmatprep.subr.mxu0 0.0
  %1044 = vmatpush1.msra.mxu0 0.0
  %1045 = vmatprep.subr.mxu0 0.0
  %1046 = vmatpush1.msra.mxu0 0.0
  %1047 = vmatprep.subr.mxu0 0.0
  %1048 = vmatpush1.msra.mxu0 0.0
  %1049 = vmatprep.subr.mxu0 0.0
  %1050 = vmatpush1.msra.mxu0 0.0
  %1051 = vmatprep.subr.mxu0 0.0
  %1052 = vmatpush1.msra.mxu0 0.0
  %1053 = vmatprep.subr.mxu0 0.0
  %1054 = vmatpush1.msra.mxu0 0.0
  %1055 = vmatprep.subr.mxu0 0.0
  %1056 = vmatpush1.msra.mxu0 0.0
  %1057 = vmatprep.subr.mxu0 0.0
  %1058 = vmatpush1.msra.mxu0 0.0
  %1059 = vmatprep.subr.mxu0 0.0
  %1060 = vmatpush1.msra.mxu0 0.0
  %1061 = vmatprep.subr.mxu0 0.0
  %1062 = vmatpush1.msra.mxu0 0.0
  %1063 = vmatprep.subr.mxu0 0.0
  %1064 = vmatpush1.msra.mxu0 0.0
  %1065 = vmatprep.subr.mxu0 0.0
  %1066 = vmatpush1.msra.mxu0 0.0
  %1067 = vmatprep.subr.mxu0 0.0
  %1068 = vmatpush1.msra.mxu0 0.0
  %1069 = vmatprep.subr.mxu0 0.0
  %1070 = vmatpush1.msra.mxu0 0.0
  %1071 = vmatprep.subr.mxu0 0.0
  %1072 = vmatpush1.msra.mxu0 0.0
  %1073 = vmatprep.subr.mxu0 0.0
  %1074 = vmatpush1.msra.mxu0 0.0
  %1075 = vmatprep.subr.mxu0 0.0
  %1076 = vmatpush1.msra.mxu0 0.0
  %1077 = vmatprep.subr.mxu0 0.0
  %1078 = vmatpush1.msra.mxu0 0.0
  %1079 = vmatprep.subr.mxu0 0.0
  %1080 = vmatpush1.msra.mxu0 0.0
  %1081 = vmatprep.subr.mxu0 0.0
  %1082 = vmatpush1.msra.mxu0 0.0
  %1083 = vmatprep.subr.mxu0 0.0
  %1084 = vmatpush1.msra.mxu0 0.0
  %1085 = vmatprep.subr.mxu0 0.0
  %1086 = vmatpush1.msra.mxu0 0.0
  %1087 = vmatprep.subr.mxu0 0.0
  %1088 = vmatpush1.msra.mxu0 0.0
  %1089 = vmatprep.mubr.f32.mxu0 0.0
  %1090 = vmatmul.mubr.f32.gmra.mrb[0].mxu0 %v1023
  %v1091 = vpop.f32.mrb[0].mxu0
  %v1092 = vadd.f32 %v234, %v1091
  %v1093 = vpop.f32.mrb[0].mxu0
  %v1094 = vadd.f32 %v236, %v1093
  %1095 = vdwg.mxu0
  %v1096 = vxor.u32 %v1092, 2147483648
  %v1097 = vxor.u32 %v1094, 2147483648
  %v1098 = vmul.f32 %v1096, 1.442695
  %v1099 = vpow.pop %v1098
  %v1100 = vmul.f32 %v1097, 1.442695
  %v1101 = vpow.pop %v1100
  %v1102 = vadd.f32 %v1099, 1.0
  %v1103 = vadd.f32 %v1101, 1.0
  %v1104 = vrcp.pop %v1102
  %v1105 = vmul.f32 1.0, %v1104
  %v1106 = vrcp.pop %v1103
  %v1107 = vmul.f32 1.0, %v1106
  %v1108 = vtanh.pop %v1094
  %v1109 = vmul.f32 %v1105, %v1015
  %1111 = vrot.lane.b32.xlu0 %v1108, 64
  %v1112 = vpop.permute.xlu0 %1111
  %v1114 = vmul.f32 %v1105, %v1112
  %1116 = vrot.lane.b32.xlu0 %v1114, 64
  %v1117 = vpop.permute.xlu0 %1116
  %v1119 = vadd.f32 %v1109, %v1117
  %v1120 = vtanh.pop %v1119
  %1122 = vrot.lane.b32.xlu0 %v1120, 64
  %v1123 = vpop.permute.xlu0 %1122
  %v1125 = vmul.f32 %v1107, %v1123
  %v1127 = vsel %vm279, %v1125, 0
  %1129 = vmatprep.subr.mxu0 %v39
  %1130 = vmatpush1.msra.mxu0 %v38
  %1131 = vmatprep.subr.mxu0 %v41
  %1132 = vmatpush1.msra.mxu0 %v40
  %1133 = vmatprep.subr.mxu0 %v43
  %1134 = vmatpush1.msra.mxu0 %v42
  %1135 = vmatprep.subr.mxu0 %v45
  %1136 = vmatpush1.msra.mxu0 %v44
  %1137 = vmatprep.subr.mxu0 %v47
  %1138 = vmatpush1.msra.mxu0 %v46
  %1139 = vmatprep.subr.mxu0 %v49
  %1140 = vmatpush1.msra.mxu0 %v48
  %1141 = vmatprep.subr.mxu0 %v51
  %1142 = vmatpush1.msra.mxu0 %v50
  %1143 = vmatprep.subr.mxu0 %v53
  %1144 = vmatpush1.msra.mxu0 %v52
  %1145 = vmatprep.subr.mxu0 0.0
  %1146 = vmatpush1.msra.mxu0 0.0
  %1147 = vmatprep.subr.mxu0 0.0
  %1148 = vmatpush1.msra.mxu0 0.0
  %1149 = vmatprep.subr.mxu0 0.0
  %1150 = vmatpush1.msra.mxu0 0.0
  %1151 = vmatprep.subr.mxu0 0.0
  %1152 = vmatpush1.msra.mxu0 0.0
  %1153 = vmatprep.subr.mxu0 0.0
  %1154 = vmatpush1.msra.mxu0 0.0
  %1155 = vmatprep.subr.mxu0 0.0
  %1156 = vmatpush1.msra.mxu0 0.0
  %1157 = vmatprep.subr.mxu0 0.0
  %1158 = vmatpush1.msra.mxu0 0.0
  %1159 = vmatprep.subr.mxu0 0.0
  %1160 = vmatpush1.msra.mxu0 0.0
  %1161 = vmatprep.subr.mxu0 0.0
  %1162 = vmatpush1.msra.mxu0 0.0
  %1163 = vmatprep.subr.mxu0 0.0
  %1164 = vmatpush1.msra.mxu0 0.0
  %1165 = vmatprep.subr.mxu0 0.0
  %1166 = vmatpush1.msra.mxu0 0.0
  %1167 = vmatprep.subr.mxu0 0.0
  %1168 = vmatpush1.msra.mxu0 0.0
  %1169 = vmatprep.subr.mxu0 0.0
  %1170 = vmatpush1.msra.mxu0 0.0
  %1171 = vmatprep.subr.mxu0 0.0
  %1172 = vmatpush1.msra.mxu0 0.0
  %1173 = vmatprep.subr.mxu0 0.0
  %1174 = vmatpush1.msra.mxu0 0.0
  %1175 = vmatprep.subr.mxu0 0.0
  %1176 = vmatpush1.msra.mxu0 0.0
  %1177 = vmatprep.subr.mxu0 0.0
  %1178 = vmatpush1.msra.mxu0 0.0
  %1179 = vmatprep.subr.mxu0 0.0
  %1180 = vmatpush1.msra.mxu0 0.0
  %1181 = vmatprep.subr.mxu0 0.0
  %1182 = vmatpush1.msra.mxu0 0.0
  %1183 = vmatprep.subr.mxu0 0.0
  %1184 = vmatpush1.msra.mxu0 0.0
  %1185 = vmatprep.subr.mxu0 0.0
  %1186 = vmatpush1.msra.mxu0 0.0
  %1187 = vmatprep.subr.mxu0 0.0
  %1188 = vmatpush1.msra.mxu0 0.0
  %1189 = vmatprep.subr.mxu0 0.0
  %1190 = vmatpush1.msra.mxu0 0.0
  %1191 = vmatprep.subr.mxu0 0.0
  %1192 = vmatpush1.msra.mxu0 0.0
  %1193 = vmatprep.mubr.f32.mxu0 0.0
  %1194 = vmatmul.mubr.f32.gmra.mrb[0].mxu0 %v1127
  %v1195 = vpop.f32.mrb[0].mxu0
  %v1196 = vadd.f32 %v240, %v1195
  %v1197 = vpop.f32.mrb[0].mxu0
  %v1198 = vadd.f32 %v242, %v1197
  %1199 = vdwg.mxu0
  %v1200 = vxor.u32 %v1196, 2147483648
  %v1201 = vxor.u32 %v1198, 2147483648
  %v1202 = vmul.f32 %v1200, 1.442695
  %v1203 = vpow.pop %v1202
  %v1204 = vmul.f32 %v1201, 1.442695
  %v1205 = vpow.pop %v1204
  %v1206 = vadd.f32 %v1203, 1.0
  %v1207 = vadd.f32 %v1205, 1.0
  %v1208 = vrcp.pop %v1206
  %v1209 = vmul.f32 1.0, %v1208
  %v1210 = vrcp.pop %v1207
  %v1211 = vmul.f32 1.0, %v1210
  %v1212 = vtanh.pop %v1198
  %v1213 = vmul.f32 %v1209, %v1119
  %1215 = vrot.lane.b32.xlu0 %v1212, 64
  %v1216 = vpop.permute.xlu0 %1215
  %v1218 = vmul.f32 %v1209, %v1216
  %1220 = vrot.lane.b32.xlu0 %v1218, 64
  %v1221 = vpop.permute.xlu0 %1220
  %v1223 = vadd.f32 %v1213, %v1221
  %v1224 = vtanh.pop %v1223
  %1226 = vrot.lane.b32.xlu0 %v1224, 64
  %v1227 = vpop.permute.xlu0 %1226
  %v1229 = vmul.f32 %v1211, %v1227
  %v1231 = vsel %vm279, %v1229, 0
  %1233 = vmatprep.subr.mxu0 %v39
  %1234 = vmatpush1.msra.mxu0 %v38
  %1235 = vmatprep.subr.mxu0 %v41
  %1236 = vmatpush1.msra.mxu0 %v40
  %1237 = vmatprep.subr.mxu0 %v43
  %1238 = vmatpush1.msra.mxu0 %v42
  %1239 = vmatprep.subr.mxu0 %v45
  %1240 = vmatpush1.msra.mxu0 %v44
  %1241 = vmatprep.subr.mxu0 %v47
  %1242 = vmatpush1.msra.mxu0 %v46
  %1243 = vmatprep.subr.mxu0 %v49
  %1244 = vmatpush1.msra.mxu0 %v48
  %1245 = vmatprep.subr.mxu0 %v51
  %1246 = vmatpush1.msra.mxu0 %v50
  %1247 = vmatprep.subr.mxu0 %v53
  %1248 = vmatpush1.msra.mxu0 %v52
  %1249 = vmatprep.subr.mxu0 0.0
  %1250 = vmatpush1.msra.mxu0 0.0
  %1251 = vmatprep.subr.mxu0 0.0
  %1252 = vmatpush1.msra.mxu0 0.0
  %1253 = vmatprep.subr.mxu0 0.0
  %1254 = vmatpush1.msra.mxu0 0.0
  %1255 = vmatprep.subr.mxu0 0.0
  %1256 = vmatpush1.msra.mxu0 0.0
  %1257 = vmatprep.subr.mxu0 0.0
  %1258 = vmatpush1.msra.mxu0 0.0
  %1259 = vmatprep.subr.mxu0 0.0
  %1260 = vmatpush1.msra.mxu0 0.0
  %1261 = vmatprep.subr.mxu0 0.0
  %1262 = vmatpush1.msra.mxu0 0.0
  %1263 = vmatprep.subr.mxu0 0.0
  %1264 = vmatpush1.msra.mxu0 0.0
  %1265 = vmatprep.subr.mxu0 0.0
  %1266 = vmatpush1.msra.mxu0 0.0
  %1267 = vmatprep.subr.mxu0 0.0
  %1268 = vmatpush1.msra.mxu0 0.0
  %1269 = vmatprep.subr.mxu0 0.0
  %1270 = vmatpush1.msra.mxu0 0.0
  %1271 = vmatprep.subr.mxu0 0.0
  %1272 = vmatpush1.msra.mxu0 0.0
  %1273 = vmatprep.subr.mxu0 0.0
  %1274 = vmatpush1.msra.mxu0 0.0
  %1275 = vmatprep.subr.mxu0 0.0
  %1276 = vmatpush1.msra.mxu0 0.0
  %1277 = vmatprep.subr.mxu0 0.0
  %1278 = vmatpush1.msra.mxu0 0.0
  %1279 = vmatprep.subr.mxu0 0.0
  %1280 = vmatpush1.msra.mxu0 0.0
  %1281 = vmatprep.subr.mxu0 0.0
  %1282 = vmatpush1.msra.mxu0 0.0
  %1283 = vmatprep.subr.mxu0 0.0
  %1284 = vmatpush1.msra.mxu0 0.0
  %1285 = vmatprep.subr.mxu0 0.0
  %1286 = vmatpush1.msra.mxu0 0.0
  %1287 = vmatprep.subr.mxu0 0.0
  %1288 = vmatpush1.msra.mxu0 0.0
  %1289 = vmatprep.subr.mxu0 0.0
  %1290 = vmatpush1.msra.mxu0 0.0
  %1291 = vmatprep.subr.mxu0 0.0
  %1292 = vmatpush1.msra.mxu0 0.0
  %1293 = vmatprep.subr.mxu0 0.0
  %1294 = vmatpush1.msra.mxu0 0.0
  %1295 = vmatprep.subr.mxu0 0.0
  %1296 = vmatpush1.msra.mxu0 0.0
  %1297 = vmatprep.mubr.f32.mxu0 0.0
  %1298 = vmatmul.mubr.f32.gmra.mrb[0].mxu0 %v1231
  %v1299 = vpop.f32.mrb[0].mxu0
  %v1300 = vadd.f32 %v246, %v1299
  %v1301 = vpop.f32.mrb[0].mxu0
  %v1302 = vadd.f32 %v248, %v1301
  %1303 = vdwg.mxu0
  %v1304 = vxor.u32 %v1300, 2147483648
  %v1305 = vxor.u32 %v1302, 2147483648
  %v1306 = vmul.f32 %v1304, 1.442695
  %v1307 = vpow.pop %v1306
  %v1308 = vmul.f32 %v1305, 1.442695
  %v1309 = vpow.pop %v1308
  %v1310 = vadd.f32 %v1307, 1.0
  %v1311 = vadd.f32 %v1309, 1.0
  %v1312 = vrcp.pop %v1310
  %v1313 = vmul.f32 1.0, %v1312
  %v1314 = vrcp.pop %v1311
  %v1315 = vmul.f32 1.0, %v1314
  %v1316 = vtanh.pop %v1302
  %v1317 = vmul.f32 %v1313, %v1223
  %1319 = vrot.lane.b32.xlu0 %v1316, 64
  %v1320 = vpop.permute.xlu0 %1319
  %v1322 = vmul.f32 %v1313, %v1320
  %1324 = vrot.lane.b32.xlu0 %v1322, 64
  %v1325 = vpop.permute.xlu0 %1324
  %v1327 = vadd.f32 %v1317, %v1325
  %v1328 = vtanh.pop %v1327
  %1330 = vrot.lane.b32.xlu0 %v1328, 64
  %v1331 = vpop.permute.xlu0 %1330
  %v1333 = vmul.f32 %v1315, %v1331
  %v1335 = vsel %vm279, %v1333, 0
  %1337 = vmatprep.subr.mxu0 %v39
  %1338 = vmatpush1.msra.mxu0 %v38
  %1339 = vmatprep.subr.mxu0 %v41
  %1340 = vmatpush1.msra.mxu0 %v40
  %1341 = vmatprep.subr.mxu0 %v43
  %1342 = vmatpush1.msra.mxu0 %v42
  %1343 = vmatprep.subr.mxu0 %v45
  %1344 = vmatpush1.msra.mxu0 %v44
  %1345 = vmatprep.subr.mxu0 %v47
  %1346 = vmatpush1.msra.mxu0 %v46
  %1347 = vmatprep.subr.mxu0 %v49
  %1348 = vmatpush1.msra.mxu0 %v48
  %1349 = vmatprep.subr.mxu0 %v51
  %1350 = vmatpush1.msra.mxu0 %v50
  %1351 = vmatprep.subr.mxu0 %v53
  %1352 = vmatpush1.msra.mxu0 %v52
  %1353 = vmatprep.subr.mxu0 0.0
  %1354 = vmatpush1.msra.mxu0 0.0
  %1355 = vmatprep.subr.mxu0 0.0
  %1356 = vmatpush1.msra.mxu0 0.0
  %1357 = vmatprep.subr.mxu0 0.0
  %1358 = vmatpush1.msra.mxu0 0.0
  %1359 = vmatprep.subr.mxu0 0.0
  %1360 = vmatpush1.msra.mxu0 0.0
  %1361 = vmatprep.subr.mxu0 0.0
  %1362 = vmatpush1.msra.mxu0 0.0
  %1363 = vmatprep.subr.mxu0 0.0
  %1364 = vmatpush1.msra.mxu0 0.0
  %1365 = vmatprep.subr.mxu0 0.0
  %1366 = vmatpush1.msra.mxu0 0.0
  %1367 = vmatprep.subr.mxu0 0.0
  %1368 = vmatpush1.msra.mxu0 0.0
  %1369 = vmatprep.subr.mxu0 0.0
  %1370 = vmatpush1.msra.mxu0 0.0
  %1371 = vmatprep.subr.mxu0 0.0
  %1372 = vmatpush1.msra.mxu0 0.0
  %1373 = vmatprep.subr.mxu0 0.0
  %1374 = vmatpush1.msra.mxu0 0.0
  %1375 = vmatprep.subr.mxu0 0.0
  %1376 = vmatpush1.msra.mxu0 0.0
  %1377 = vmatprep.subr.mxu0 0.0
  %1378 = vmatpush1.msra.mxu0 0.0
  %1379 = vmatprep.subr.mxu0 0.0
  %1380 = vmatpush1.msra.mxu0 0.0
  %1381 = vmatprep.subr.mxu0 0.0
  %1382 = vmatpush1.msra.mxu0 0.0
  %1383 = vmatprep.subr.mxu0 0.0
  %1384 = vmatpush1.msra.mxu0 0.0
  %1385 = vmatprep.subr.mxu0 0.0
  %1386 = vmatpush1.msra.mxu0 0.0
  %1387 = vmatprep.subr.mxu0 0.0
  %1388 = vmatpush1.msra.mxu0 0.0
  %1389 = vmatprep.subr.mxu0 0.0
  %1390 = vmatpush1.msra.mxu0 0.0
  %1391 = vmatprep.subr.mxu0 0.0
  %1392 = vmatpush1.msra.mxu0 0.0
  %1393 = vmatprep.subr.mxu0 0.0
  %1394 = vmatpush1.msra.mxu0 0.0
  %1395 = vmatprep.subr.mxu0 0.0
  %1396 = vmatpush1.msra.mxu0 0.0
  %1397 = vmatprep.subr.mxu0 0.0
  %1398 = vmatpush1.msra.mxu0 0.0
  %1399 = vmatprep.subr.mxu0 0.0
  %1400 = vmatpush1.msra.mxu0 0.0
  %1401 = vmatprep.mubr.f32.mxu0 0.0
  %1402 = vmatmul.mubr.f32.gmra.mrb[0].mxu0 %v1335
  %v1403 = vpop.f32.mrb[0].mxu0
  %v1404 = vadd.f32 %v252, %v1403
  %v1405 = vpop.f32.mrb[0].mxu0
  %v1406 = vadd.f32 %v254, %v1405
  %1407 = vdwg.mxu0
  %v1408 = vxor.u32 %v1404, 2147483648
  %v1409 = vxor.u32 %v1406, 2147483648
  %v1410 = vmul.f32 %v1408, 1.442695
  %v1411 = vpow.pop %v1410
  %v1412 = vmul.f32 %v1409, 1.442695
  %v1413 = vpow.pop %v1412
  %v1414 = vadd.f32 %v1411, 1.0
  %v1415 = vadd.f32 %v1413, 1.0
  %v1416 = vrcp.pop %v1414
  %v1417 = vmul.f32 1.0, %v1416
  %v1418 = vrcp.pop %v1415
  %v1419 = vmul.f32 1.0, %v1418
  %v1420 = vtanh.pop %v1406
  %v1421 = vmul.f32 %v1417, %v1327
  %1423 = vrot.lane.b32.xlu0 %v1420, 64
  %v1424 = vpop.permute.xlu0 %1423
  %v1426 = vmul.f32 %v1417, %v1424
  %1428 = vrot.lane.b32.xlu0 %v1426, 64
  %v1429 = vpop.permute.xlu0 %1428
  %v1431 = vadd.f32 %v1421, %v1429
  %v1432 = vtanh.pop %v1431
  %1434 = vrot.lane.b32.xlu0 %v1432, 64
  %v1435 = vpop.permute.xlu0 %1434
  %v1437 = vmul.f32 %v1419, %v1435
  %v1439 = vsel %vm279, %v1437, 0
  %1441 = vmatprep.subr.mxu0 %v39
  %1442 = vmatpush1.msra.mxu0 %v38
  %1443 = vmatprep.subr.mxu0 %v41
  %1444 = vmatpush1.msra.mxu0 %v40
  %1445 = vmatprep.subr.mxu0 %v43
  %1446 = vmatpush1.msra.mxu0 %v42
  %1447 = vmatprep.subr.mxu0 %v45
  %1448 = vmatpush1.msra.mxu0 %v44
  %1449 = vmatprep.subr.mxu0 %v47
  %1450 = vmatpush1.msra.mxu0 %v46
  %1451 = vmatprep.subr.mxu0 %v49
  %1452 = vmatpush1.msra.mxu0 %v48
  %1453 = vmatprep.subr.mxu0 %v51
  %1454 = vmatpush1.msra.mxu0 %v50
  %1455 = vmatprep.subr.mxu0 %v53
  %1456 = vmatpush1.msra.mxu0 %v52
  %1457 = vmatprep.subr.mxu0 0.0
  %1458 = vmatpush1.msra.mxu0 0.0
  %1459 = vmatprep.subr.mxu0 0.0
  %1460 = vmatpush1.msra.mxu0 0.0
  %1461 = vmatprep.subr.mxu0 0.0
  %1462 = vmatpush1.msra.mxu0 0.0
  %1463 = vmatprep.subr.mxu0 0.0
  %1464 = vmatpush1.msra.mxu0 0.0
  %1465 = vmatprep.subr.mxu0 0.0
  %1466 = vmatpush1.msra.mxu0 0.0
  %1467 = vmatprep.subr.mxu0 0.0
  %1468 = vmatpush1.msra.mxu0 0.0
  %1469 = vmatprep.subr.mxu0 0.0
  %1470 = vmatpush1.msra.mxu0 0.0
  %1471 = vmatprep.subr.mxu0 0.0
  %1472 = vmatpush1.msra.mxu0 0.0
  %1473 = vmatprep.subr.mxu0 0.0
  %1474 = vmatpush1.msra.mxu0 0.0
  %1475 = vmatprep.subr.mxu0 0.0
  %1476 = vmatpush1.msra.mxu0 0.0
  %1477 = vmatprep.subr.mxu0 0.0
  %1478 = vmatpush1.msra.mxu0 0.0
  %1479 = vmatprep.subr.mxu0 0.0
  %1480 = vmatpush1.msra.mxu0 0.0
  %1481 = vmatprep.subr.mxu0 0.0
  %1482 = vmatpush1.msra.mxu0 0.0
  %1483 = vmatprep.subr.mxu0 0.0
  %1484 = vmatpush1.msra.mxu0 0.0
  %1485 = vmatprep.subr.mxu0 0.0
  %1486 = vmatpush1.msra.mxu0 0.0
  %1487 = vmatprep.subr.mxu0 0.0
  %1488 = vmatpush1.msra.mxu0 0.0
  %1489 = vmatprep.subr.mxu0 0.0
  %1490 = vmatpush1.msra.mxu0 0.0
  %1491 = vmatprep.subr.mxu0 0.0
  %1492 = vmatpush1.msra.mxu0 0.0
  %1493 = vmatprep.subr.mxu0 0.0
  %1494 = vmatpush1.msra.mxu0 0.0
  %1495 = vmatprep.subr.mxu0 0.0
  %1496 = vmatpush1.msra.mxu0 0.0
  %1497 = vmatprep.subr.mxu0 0.0
  %1498 = vmatpush1.msra.mxu0 0.0
  %1499 = vmatprep.subr.mxu0 0.0
  %1500 = vmatpush1.msra.mxu0 0.0
  %1501 = vmatprep.subr.mxu0 0.0
  %1502 = vmatpush1.msra.mxu0 0.0
  %1503 = vmatprep.subr.mxu0 0.0
  %1504 = vmatpush1.msra.mxu0 0.0
  %1505 = vmatprep.mubr.f32.mxu0 0.0
  %1506 = vmatmul.mubr.f32.gmra.mrb[0].mxu0 %v1439
  %v1507 = vpop.f32.mrb[0].mxu0
  %v1508 = vadd.f32 %v258, %v1507
  %v1509 = vpop.f32.mrb[0].mxu0
  %v1510 = vadd.f32 %v260, %v1509
  %1511 = vdwg.mxu0
  %v1512 = vxor.u32 %v1508, 2147483648
  %v1513 = vxor.u32 %v1510, 2147483648
  %v1514 = vmul.f32 %v1512, 1.442695
  %v1515 = vpow.pop %v1514
  %v1516 = vmul.f32 %v1513, 1.442695
  %v1517 = vpow.pop %v1516
  %v1518 = vadd.f32 %v1515, 1.0
  %v1519 = vadd.f32 %v1517, 1.0
  %v1520 = vrcp.pop %v1518
  %v1521 = vmul.f32 1.0, %v1520
  %v1522 = vrcp.pop %v1519
  %v1523 = vmul.f32 1.0, %v1522
  %v1524 = vtanh.pop %v1510
  %v1525 = vmul.f32 %v1521, %v1431
  %1527 = vrot.lane.b32.xlu0 %v1524, 64
  %v1528 = vpop.permute.xlu0 %1527
  %v1530 = vmul.f32 %v1521, %v1528
  %1532 = vrot.lane.b32.xlu0 %v1530, 64
  %v1533 = vpop.permute.xlu0 %1532
  %v1535 = vadd.f32 %v1525, %v1533
  %v1536 = vtanh.pop %v1535
  %1538 = vrot.lane.b32.xlu0 %v1536, 64
  %v1539 = vpop.permute.xlu0 %1538
  %v1541 = vmul.f32 %v1523, %v1539
  %1542 = vst.msk [vmem:[%s11] sm:$0xff] %vm271, %v1541
  %1544 = vrot.lane.b32.xlu0 %v1535, 64
  %v1545 = vpop.permute.xlu0 %1544
  %1547 = vst.msk [vmem:[%s12] sm:$0xff] %vm271, %v1545
  %v1549 = vsel %vm279, %v1541, 0
  %1551 = vmatprep.subr.mxu0 %v39
  %1552 = vmatpush1.msra.mxu0 %v38
  %1553 = vmatprep.subr.mxu0 %v41
  %1554 = vmatpush1.msra.mxu0 %v40
  %1555 = vmatprep.subr.mxu0 %v43
  %1556 = vmatpush1.msra.mxu0 %v42
  %1557 = vmatprep.subr.mxu0 %v45
  %1558 = vmatpush1.msra.mxu0 %v44
  %1559 = vmatprep.subr.mxu0 %v47
  %1560 = vmatpush1.msra.mxu0 %v46
  %1561 = vmatprep.subr.mxu0 %v49
  %1562 = vmatpush1.msra.mxu0 %v48
  %1563 = vmatprep.subr.mxu0 %v51
  %1564 = vmatpush1.msra.mxu0 %v50
  %1565 = vmatprep.subr.mxu0 %v53
  %1566 = vmatpush1.msra.mxu0 %v52
  %1567 = vmatprep.subr.mxu0 0.0
  %1568 = vmatpush1.msra.mxu0 0.0
  %1569 = vmatprep.subr.mxu0 0.0
  %1570 = vmatpush1.msra.mxu0 0.0
  %1571 = vmatprep.subr.mxu0 0.0
  %1572 = vmatpush1.msra.mxu0 0.0
  %1573 = vmatprep.subr.mxu0 0.0
  %1574 = vmatpush1.msra.mxu0 0.0
  %1575 = vmatprep.subr.mxu0 0.0
  %1576 = vmatpush1.msra.mxu0 0.0
  %1577 = vmatprep.subr.mxu0 0.0
  %1578 = vmatpush1.msra.mxu0 0.0
  %1579 = vmatprep.subr.mxu0 0.0
  %1580 = vmatpush1.msra.mxu0 0.0
  %1581 = vmatprep.subr.mxu0 0.0
  %1582 = vmatpush1.msra.mxu0 0.0
  %1583 = vmatprep.subr.mxu0 0.0
  %1584 = vmatpush1.msra.mxu0 0.0
  %1585 = vmatprep.subr.mxu0 0.0
  %1586 = vmatpush1.msra.mxu0 0.0
  %1587 = vmatprep.subr.mxu0 0.0
  %1588 = vmatpush1.msra.mxu0 0.0
  %1589 = vmatprep.subr.mxu0 0.0
  %1590 = vmatpush1.msra.mxu0 0.0
  %1591 = vmatprep.subr.mxu0 0.0
  %1592 = vmatpush1.msra.mxu0 0.0
  %1593 = vmatprep.subr.mxu0 0.0
  %1594 = vmatpush1.msra.mxu0 0.0
  %1595 = vmatprep.subr.mxu0 0.0
  %1596 = vmatpush1.msra.mxu0 0.0
  %1597 = vmatprep.subr.mxu0 0.0
  %1598 = vmatpush1.msra.mxu0 0.0
  %1599 = vmatprep.subr.mxu0 0.0
  %1600 = vmatpush1.msra.mxu0 0.0
  %1601 = vmatprep.subr.mxu0 0.0
  %1602 = vmatpush1.msra.mxu0 0.0
  %1603 = vmatprep.subr.mxu0 0.0
  %1604 = vmatpush1.msra.mxu0 0.0
  %1605 = vmatprep.subr.mxu0 0.0
  %1606 = vmatpush1.msra.mxu0 0.0
  %1607 = vmatprep.subr.mxu0 0.0
  %1608 = vmatpush1.msra.mxu0 0.0
  %1609 = vmatprep.subr.mxu0 0.0
  %1610 = vmatpush1.msra.mxu0 0.0
  %1611 = vmatprep.subr.mxu0 0.0
  %1612 = vmatpush1.msra.mxu0 0.0
  %1613 = vmatprep.subr.mxu0 0.0
  %1614 = vmatpush1.msra.mxu0 0.0
  %1615 = vmatprep.mubr.f32.mxu0 0.0
  %1616 = vmatmul.mubr.f32.gmra.mrb[0].mxu0 %v1549
  %v1617 = vpop.f32.mrb[0].mxu0
  %v1618 = vadd.f32 %v258, %v1617
  %v1619 = vpop.f32.mrb[0].mxu0
  %v1620 = vadd.f32 %v260, %v1619
  %1621 = vdwg.mxu0
  %v1622 = vxor.u32 %v1618, 2147483648
  %v1623 = vxor.u32 %v1620, 2147483648
  %v1624 = vmul.f32 %v1622, 1.442695
  %v1625 = vpow.pop %v1624
  %v1626 = vmul.f32 %v1623, 1.442695
  %v1627 = vpow.pop %v1626
  %v1628 = vadd.f32 %v1625, 1.0
  %v1629 = vadd.f32 %v1627, 1.0
  %v1630 = vrcp.pop %v1628
  %v1631 = vmul.f32 1.0, %v1630
  %v1632 = vrcp.pop %v1629
  %v1633 = vmul.f32 1.0, %v1632
  %v1634 = vtanh.pop %v1620
  %v1635 = vmul.f32 %v1631, %v1535
  %1637 = vrot.lane.b32.xlu0 %v1634, 64
  %v1638 = vpop.permute.xlu0 %1637
  %v1640 = vmul.f32 %v1631, %v1638
  %1642 = vrot.lane.b32.xlu0 %v1640, 64
  %v1643 = vpop.permute.xlu0 %1642
  %v1645 = vadd.f32 %v1635, %v1643
  %v1646 = vtanh.pop %v1645
  %1648 = vrot.lane.b32.xlu0 %v1646, 64
  %v1649 = vpop.permute.xlu0 %1648
  %v1651 = vmul.f32 %v1633, %v1649
  %1653 = vrot.lane.b32.xlu0 %v1651, 96
  %v1654 = vpop.permute.xlu0 %1653
  %s1656 = scalar_lea.vmem %s11, 8
  %1657 = vst.msk [vmem:[%s1656] sm:$0xff] %vm271, %v1654
  %1659 = vrot.lane.b32.xlu0 %v1645, 32
  %v1660 = vpop.permute.xlu0 %1659
  %s1662 = scalar_lea.vmem %s12, 8
  %1663 = vst.msk [vmem:[%s1662] sm:$0xff] %vm271, %v1660
  %v1665 = vlaneseq
  %v1666 = vshrl.u32 %v1665, 7
  %v1667 = vsub.s32 0, %v1666
  %v1668 = vrot.slane %v58, %v1667
  %1670 = vrot.lane.b32.xlu0 %v709, 96
  %v1671 = vpop.permute.xlu0 %1670
  %1672 = vrot.lane.b32.xlu0 %v813, 96
  %v1673 = vpop.permute.xlu0 %1672
  %1674 = vrot.lane.b32.xlu0 %v917, 96
  %v1675 = vpop.permute.xlu0 %1674
  %1676 = vrot.lane.b32.xlu0 %v1021, 96
  %v1677 = vpop.permute.xlu0 %1676
  %1678 = vrot.lane.b32.xlu0 %v1125, 96
  %v1679 = vpop.permute.xlu0 %1678
  %1680 = vrot.lane.b32.xlu0 %v1229, 96
  %v1681 = vpop.permute.xlu0 %1680
  %1682 = vrot.lane.b32.xlu0 %v1333, 96
  %v1683 = vpop.permute.xlu0 %1682
  %1684 = vrot.lane.b32.xlu0 %v1437, 96
  %v1685 = vpop.permute.xlu0 %1684
  %1686 = vrot.lane.b32.xlu0 %v1541, 96
  %v1687 = vpop.permute.xlu0 %1686
  %v1688 = vsel %vm271, %v1671, 0
  %v1690 = vsel %vm271, %v1673, 0
  %v1692 = vsel %vm271, %v1675, 0
  %v1694 = vsel %vm271, %v1677, 0
  %v1696 = vsel %vm271, %v1679, 0
  %v1698 = vsel %vm271, %v1681, 0
  %v1700 = vsel %vm271, %v1683, 0
  %v1702 = vsel %vm271, %v1685, 0
  %v1704 = vsel %vm271, %v1687, 0
  %v1706 = vsel %vm271, %v1654, 0
  %1708 = vmatprep.subr.mxu0 0.0
  %1709 = vmatpush1.msra.mxu0 %v54
  %1710 = vmatprep.subr.mxu0 0.0
  %1711 = vmatpush1.msra.mxu0 %v55
  %1712 = vmatprep.subr.mxu0 0.0
  %1713 = vmatpush1.msra.mxu0 %v56
  %1714 = vmatprep.subr.mxu0 0.0
  %1715 = vmatpush1.msra.mxu0 %v57
  %1716 = vmatprep.subr.mxu0 0.0
  %1717 = vmatpush1.msra.mxu0 0.0
  %1718 = vmatprep.subr.mxu0 0.0
  %1719 = vmatpush1.msra.mxu0 0.0
  %1720 = vmatprep.subr.mxu0 0.0
  %1721 = vmatpush1.msra.mxu0 0.0
  %1722 = vmatprep.subr.mxu0 0.0
  %1723 = vmatpush1.msra.mxu0 0.0
  %1724 = vmatprep.subr.mxu0 0.0
  %1725 = vmatpush1.msra.mxu0 0.0
  %1726 = vmatprep.subr.mxu0 0.0
  %1727 = vmatpush1.msra.mxu0 0.0
  %1728 = vmatprep.subr.mxu0 0.0
  %1729 = vmatpush1.msra.mxu0 0.0
  %1730 = vmatprep.subr.mxu0 0.0
  %1731 = vmatpush1.msra.mxu0 0.0
  %1732 = vmatprep.subr.mxu0 0.0
  %1733 = vmatpush1.msra.mxu0 0.0
  %1734 = vmatprep.subr.mxu0 0.0
  %1735 = vmatpush1.msra.mxu0 0.0
  %1736 = vmatprep.subr.mxu0 0.0
  %1737 = vmatpush1.msra.mxu0 0.0
  %1738 = vmatprep.subr.mxu0 0.0
  %1739 = vmatpush1.msra.mxu0 0.0
  %1740 = vmatprep.subr.mxu0 0.0
  %1741 = vmatpush1.msra.mxu0 0.0
  %1742 = vmatprep.subr.mxu0 0.0
  %1743 = vmatpush1.msra.mxu0 0.0
  %1744 = vmatprep.subr.mxu0 0.0
  %1745 = vmatpush1.msra.mxu0 0.0
  %1746 = vmatprep.subr.mxu0 0.0
  %1747 = vmatpush1.msra.mxu0 0.0
  %1748 = vmatprep.subr.mxu0 0.0
  %1749 = vmatpush1.msra.mxu0 0.0
  %1750 = vmatprep.subr.mxu0 0.0
  %1751 = vmatpush1.msra.mxu0 0.0
  %1752 = vmatprep.subr.mxu0 0.0
  %1753 = vmatpush1.msra.mxu0 0.0
  %1754 = vmatprep.subr.mxu0 0.0
  %1755 = vmatpush1.msra.mxu0 0.0
  %1756 = vmatprep.subr.mxu0 0.0
  %1757 = vmatpush1.msra.mxu0 0.0
  %1758 = vmatprep.subr.mxu0 0.0
  %1759 = vmatpush1.msra.mxu0 0.0
  %1760 = vmatprep.subr.mxu0 0.0
  %1761 = vmatpush1.msra.mxu0 0.0
  %1762 = vmatprep.subr.mxu0 0.0
  %1763 = vmatpush1.msra.mxu0 0.0
  %1764 = vmatprep.subr.mxu0 0.0
  %1765 = vmatpush1.msra.mxu0 0.0
  %1766 = vmatprep.subr.mxu0 0.0
  %1767 = vmatpush1.msra.mxu0 0.0
  %1768 = vmatprep.subr.mxu0 0.0
  %1769 = vmatpush1.msra.mxu0 0.0
  %1770 = vmatprep.subr.mxu0 0.0
  %1771 = vmatpush1.msra.mxu0 0.0
  %1772 = vmatprep.mubr.f32.mxu0 0.0
  %1773 = vmatmul.mubr.f32.gmra.mrb[0].mxu0 %v1688
  %v1774 = vpop.f32.mrb[0].mxu0
  %v1775 = vadd.f32 %v1668, %v1774
  %v1776 = vpop.f32.mrb[0].mxu0
  %1777 = vmatprep.mubr.f32.mxu0 0.0
  %1778 = vmatmul.mubr.f32.gmra.mrb[0].mxu0 %v1690
  %v1779 = vpop.f32.mrb[0].mxu0
  %v1780 = vadd.f32 %v1668, %v1779
  %v1781 = vpop.f32.mrb[0].mxu0
  %1782 = vmatprep.mubr.f32.mxu0 0.0
  %1783 = vmatmul.mubr.f32.gmra.mrb[0].mxu0 %v1692
  %v1784 = vpop.f32.mrb[0].mxu0
  %v1785 = vadd.f32 %v1668, %v1784
  %v1786 = vpop.f32.mrb[0].mxu0
  %1787 = vmatprep.mubr.f32.mxu0 0.0
  %1788 = vmatmul.mubr.f32.gmra.mrb[0].mxu0 %v1694
  %v1789 = vpop.f32.mrb[0].mxu0
  %v1790 = vadd.f32 %v1668, %v1789
  %v1791 = vpop.f32.mrb[0].mxu0
  %1792 = vmatprep.mubr.f32.mxu0 0.0
  %1793 = vmatmul.mubr.f32.gmra.mrb[0].mxu0 %v1696
  %v1794 = vpop.f32.mrb[0].mxu0
  %v1795 = vadd.f32 %v1668, %v1794
  %v1796 = vpop.f32.mrb[0].mxu0
  %1797 = vmatprep.mubr.f32.mxu0 0.0
  %1798 = vmatmul.mubr.f32.gmra.mrb[0].mxu0 %v1698
  %v1799 = vpop.f32.mrb[0].mxu0
  %v1800 = vadd.f32 %v1668, %v1799
  %v1801 = vpop.f32.mrb[0].mxu0
  %1802 = vmatprep.mubr.f32.mxu0 0.0
  %1803 = vmatmul.mubr.f32.gmra.mrb[0].mxu0 %v1700
  %v1804 = vpop.f32.mrb[0].mxu0
  %v1805 = vadd.f32 %v1668, %v1804
  %v1806 = vpop.f32.mrb[0].mxu0
  %1807 = vmatprep.mubr.f32.mxu0 0.0
  %1808 = vmatmul.mubr.f32.gmra.mrb[0].mxu0 %v1702
  %v1809 = vpop.f32.mrb[0].mxu0
  %v1810 = vadd.f32 %v1668, %v1809
  %v1811 = vpop.f32.mrb[0].mxu0
  %1812 = vmatprep.mubr.f32.mxu0 0.0
  %1813 = vmatmul.mubr.f32.gmra.mrb[0].mxu0 %v1704
  %v1814 = vpop.f32.mrb[0].mxu0
  %v1815 = vadd.f32 %v1668, %v1814
  %v1816 = vpop.f32.mrb[0].mxu0
  %1817 = vmatprep.mubr.f32.mxu0 0.0
  %1818 = vmatmul.mubr.f32.gmra.mrb[0].mxu0 %v1706
  %v1819 = vpop.f32.mrb[0].mxu0
  %v1820 = vadd.f32 %v1668, %v1819
  %v1821 = vpop.f32.mrb[0].mxu0
  %1822 = vdwg.mxu0
  %v1823 = vmax.f32 %v1775, 0.0
  %v1824 = vmax.f32 %v1780, 0.0
  %v1825 = vmax.f32 %v1785, 0.0
  %v1826 = vmax.f32 %v1790, 0.0
  %v1827 = vmax.f32 %v1795, 0.0
  %v1828 = vmax.f32 %v1800, 0.0
  %v1829 = vmax.f32 %v1805, 0.0
  %v1830 = vmax.f32 %v1810, 0.0
  %v1831 = vmax.f32 %v1815, 0.0
  %v1832 = vmax.f32 %v1820, 0.0
  %v1834 = vlaneseq
  %v1835 = vshrl.u32 %v1834, 7
  %v1836 = vsub.s32 0, %v1835
  %v1837 = vrot.slane %v61, %v1836
  %vm1839 = vcmask 130048
  %v1841 = vsel %vm1839, %v1823, 0
  %v1844 = vsel %vm1839, %v1824, 0
  %v1847 = vsel %vm1839, %v1825, 0
  %v1850 = vsel %vm1839, %v1826, 0
  %v1853 = vsel %vm1839, %v1827, 0
  %v1856 = vsel %vm1839, %v1828, 0
  %v1859 = vsel %vm1839, %v1829, 0
  %v1862 = vsel %vm1839, %v1830, 0
  %v1865 = vsel %vm1839, %v1831, 0
  %v1868 = vsel %vm1839, %v1832, 0
  %1870 = vmatprep.subr.mxu0 0.0
  %1871 = vmatpush1.msra.mxu0 %v59
  %1872 = vmatprep.subr.mxu0 0.0
  %1873 = vmatpush1.msra.mxu0 %v60
  %1874 = vmatprep.subr.mxu0 0.0
  %1875 = vmatpush1.msra.mxu0 0.0
  %1876 = vmatprep.subr.mxu0 0.0
  %1877 = vmatpush1.msra.mxu0 0.0
  %1878 = vmatprep.subr.mxu0 0.0
  %1879 = vmatpush1.msra.mxu0 0.0
  %1880 = vmatprep.subr.mxu0 0.0
  %1881 = vmatpush1.msra.mxu0 0.0
  %1882 = vmatprep.subr.mxu0 0.0
  %1883 = vmatpush1.msra.mxu0 0.0
  %1884 = vmatprep.subr.mxu0 0.0
  %1885 = vmatpush1.msra.mxu0 0.0
  %1886 = vmatprep.subr.mxu0 0.0
  %1887 = vmatpush1.msra.mxu0 0.0
  %1888 = vmatprep.subr.mxu0 0.0
  %1889 = vmatpush1.msra.mxu0 0.0
  %1890 = vmatprep.subr.mxu0 0.0
  %1891 = vmatpush1.msra.mxu0 0.0
  %1892 = vmatprep.subr.mxu0 0.0
  %1893 = vmatpush1.msra.mxu0 0.0
  %1894 = vmatprep.subr.mxu0 0.0
  %1895 = vmatpush1.msra.mxu0 0.0
  %1896 = vmatprep.subr.mxu0 0.0
  %1897 = vmatpush1.msra.mxu0 0.0
  %1898 = vmatprep.subr.mxu0 0.0
  %1899 = vmatpush1.msra.mxu0 0.0
  %1900 = vmatprep.subr.mxu0 0.0
  %1901 = vmatpush1.msra.mxu0 0.0
  %1902 = vmatprep.subr.mxu0 0.0
  %1903 = vmatpush1.msra.mxu0 0.0
  %1904 = vmatprep.subr.mxu0 0.0
  %1905 = vmatpush1.msra.mxu0 0.0
  %1906 = vmatprep.subr.mxu0 0.0
  %1907 = vmatpush1.msra.mxu0 0.0
  %1908 = vmatprep.subr.mxu0 0.0
  %1909 = vmatpush1.msra.mxu0 0.0
  %1910 = vmatprep.subr.mxu0 0.0
  %1911 = vmatpush1.msra.mxu0 0.0
  %1912 = vmatprep.subr.mxu0 0.0
  %1913 = vmatpush1.msra.mxu0 0.0
  %1914 = vmatprep.subr.mxu0 0.0
  %1915 = vmatpush1.msra.mxu0 0.0
  %1916 = vmatprep.subr.mxu0 0.0
  %1917 = vmatpush1.msra.mxu0 0.0
  %1918 = vmatprep.subr.mxu0 0.0
  %1919 = vmatpush1.msra.mxu0 0.0
  %1920 = vmatprep.subr.mxu0 0.0
  %1921 = vmatpush1.msra.mxu0 0.0
  %1922 = vmatprep.subr.mxu0 0.0
  %1923 = vmatpush1.msra.mxu0 0.0
  %1924 = vmatprep.subr.mxu0 0.0
  %1925 = vmatpush1.msra.mxu0 0.0
  %1926 = vmatprep.subr.mxu0 0.0
  %1927 = vmatpush1.msra.mxu0 0.0
  %1928 = vmatprep.subr.mxu0 0.0
  %1929 = vmatpush1.msra.mxu0 0.0
  %1930 = vmatprep.subr.mxu0 0.0
  %1931 = vmatpush1.msra.mxu0 0.0
  %1932 = vmatprep.subr.mxu0 0.0
  %1933 = vmatpush1.msra.mxu0 0.0
  %1934 = vmatprep.mubr.f32.mxu0 0.0
  %1935 = vmatmul.mubr.f32.gmra.mrb[0].mxu0 %v1841
  %v1936 = vpop.f32.mrb[0].mxu0
  %v1937 = vadd.f32 %v1837, %v1936
  %v1938 = vpop.f32.mrb[0].mxu0
  %1939 = vmatprep.mubr.f32.mxu0 0.0
  %1940 = vmatmul.mubr.f32.gmra.mrb[0].mxu0 %v1844
  %v1941 = vpop.f32.mrb[0].mxu0
  %v1942 = vadd.f32 %v1837, %v1941
  %v1943 = vpop.f32.mrb[0].mxu0
  %1944 = vmatprep.mubr.f32.mxu0 0.0
  %1945 = vmatmul.mubr.f32.gmra.mrb[0].mxu0 %v1847
  %v1946 = vpop.f32.mrb[0].mxu0
  %v1947 = vadd.f32 %v1837, %v1946
  %v1948 = vpop.f32.mrb[0].mxu0
  %1949 = vmatprep.mubr.f32.mxu0 0.0
  %1950 = vmatmul.mubr.f32.gmra.mrb[0].mxu0 %v1850
  %v1951 = vpop.f32.mrb[0].mxu0
  %v1952 = vadd.f32 %v1837, %v1951
  %v1953 = vpop.f32.mrb[0].mxu0
  %1954 = vmatprep.mubr.f32.mxu0 0.0
  %1955 = vmatmul.mubr.f32.gmra.mrb[0].mxu0 %v1853
  %v1956 = vpop.f32.mrb[0].mxu0
  %v1957 = vadd.f32 %v1837, %v1956
  %v1958 = vpop.f32.mrb[0].mxu0
  %1959 = vmatprep.mubr.f32.mxu0 0.0
  %1960 = vmatmul.mubr.f32.gmra.mrb[0].mxu0 %v1856
  %v1961 = vpop.f32.mrb[0].mxu0
  %v1962 = vadd.f32 %v1837, %v1961
  %v1963 = vpop.f32.mrb[0].mxu0
  %1964 = vmatprep.mubr.f32.mxu0 0.0
  %1965 = vmatmul.mubr.f32.gmra.mrb[0].mxu0 %v1859
  %v1966 = vpop.f32.mrb[0].mxu0
  %v1967 = vadd.f32 %v1837, %v1966
  %v1968 = vpop.f32.mrb[0].mxu0
  %1969 = vmatprep.mubr.f32.mxu0 0.0
  %1970 = vmatmul.mubr.f32.gmra.mrb[0].mxu0 %v1862
  %v1971 = vpop.f32.mrb[0].mxu0
  %v1972 = vadd.f32 %v1837, %v1971
  %v1973 = vpop.f32.mrb[0].mxu0
  %1974 = vmatprep.mubr.f32.mxu0 0.0
  %1975 = vmatmul.mubr.f32.gmra.mrb[0].mxu0 %v1865
  %v1976 = vpop.f32.mrb[0].mxu0
  %v1977 = vadd.f32 %v1837, %v1976
  %v1978 = vpop.f32.mrb[0].mxu0
  %1979 = vmatprep.mubr.f32.mxu0 0.0
  %1980 = vmatmul.mubr.f32.gmra.mrb[0].mxu0 %v1868
  %v1981 = vpop.f32.mrb[0].mxu0
  %v1982 = vadd.f32 %v1837, %v1981
  %v1983 = vpop.f32.mrb[0].mxu0
  %1984 = vdwg.mxu0
  %vm1985 = vcmask 31744
  %1986 = vst.msk [vmem:[%s10] sm:$0xff] %vm1985, %v1937
  %1987 = vst.msk [vmem:[%s10 + $0x8] sm:$0xff] %vm1985, %v1942
  %1988 = vst.msk [vmem:[%s10 + $0x10] sm:$0xff] %vm1985, %v1947
  %1989 = vst.msk [vmem:[%s10 + $0x18] sm:$0xff] %vm1985, %v1952
  %1990 = vst.msk [vmem:[%s10 + $0x20] sm:$0xff] %vm1985, %v1957
  %1991 = vst.msk [vmem:[%s10 + $0x28] sm:$0xff] %vm1985, %v1962
  %1992 = vst.msk [vmem:[%s10 + $0x30] sm:$0xff] %vm1985, %v1967
  %1993 = vst.msk [vmem:[%s10 + $0x38] sm:$0xff] %vm1985, %v1972
  %1994 = vst.msk [vmem:[%s10 + $0x40] sm:$0xff] %vm1985, %v1977
  %1995 = vst.msk [vmem:[%s10 + $0x48] sm:$0xff] %vm1985, %v1982
  // Predicated region
  $region42: #{net_lstm_forward.1} parent=0 // pred_check
    _
  $region43: #{net_lstm_forward.1} parent=0 // pred_check_branch
    %1997 = sbr.rel (0) target = $region45
  $region44: #{net_lstm_forward.1} parent=0 // pred_region
    _
  $region45: #{net_lstm_forward.1} parent=0 // pred_fallthru
    _
  // Predicated region
  $region46: #{net_lstm_forward.1} parent=0 // pred_check
    _
  $region47: #{net_lstm_forward.1} parent=0 // pred_check_branch
    %1999 = sbr.rel (0) target = $region49
  $region48: #{net_lstm_forward.1} parent=0 // pred_region
    _
  $region49: #{net_lstm_forward.1} parent=0 // pred_fallthru
    _
  // Predicated region
  $region50: #{net_lstm_forward.1} parent=0 // pred_check
    _
  $region51: #{net_lstm_forward.1} parent=0 // pred_check_branch
    %2001 = sbr.rel (0) target = $region53
  $region52: #{net_lstm_forward.1} parent=0 // pred_region
    _
  $region53: #{net_lstm_forward.1} parent=0 // pred_fallthru
    _
  // Predicated region
  $region54: #{net_lstm_forward.1} parent=0 // pred_check
    _
  $region55: #{net_lstm_forward.1} parent=0 // pred_check_branch
    %2003 = sbr.rel (0) target = $region57
  $region56: #{net_lstm_forward.1} parent=0 // pred_region
    _
  $region57: #{net_lstm_forward.1} parent=0 // pred_fallthru
    _
  // Predicated region
  $region58: #{net_lstm_forward.1} parent=0 // pred_check
    _
  $region59: #{net_lstm_forward.1} parent=0 // pred_check_branch
    %2005 = sbr.rel (0) target = $region61
  $region60: #{net_lstm_forward.1} parent=0 // pred_region
    _
  $region61: #{net_lstm_forward.1} parent=0 // pred_fallthru
    _
  // Predicated region
  $region62: #{net_lstm_forward.1} parent=0 // pred_check
    _
  $region63: #{net_lstm_forward.1} parent=0 // pred_check_branch
    %2007 = sbr.rel (0) target = $region65
  $region64: #{net_lstm_forward.1} parent=0 // pred_region
    _
  $region65: #{net_lstm_forward.1} parent=0 // pred_fallthru
    _

</llo_original>
